<compile_context>
chip_gen: v7x
topology: tpu7x:2x2x1
jax: 0.10.0
libtpu: 0.0.40
codegen_flags: <defaults>
</compile_context>

<pallas_src>
import functools

import jax
import jax.numpy as jnp
from jax.experimental import pallas as pl
from jax.experimental.pallas import tpu as pltpu

LANE = 128      # vreg lane width   -> feature-dim padding target
SUBLANE = 8     # vreg sublane width -> batch-tile multiple
_NEG = -1e30    # softmax-neutral bias for padded logit columns


def _rup(n, m):
    return pl.cdiv(n, m) * m


def _default_num_cores():
    """Grid steps per chip: v5e/v6e have 1 TensorCore, v7x has 2."""
    try:
        kind = (getattr(jax.devices()[0], "device_kind", "") or "").lower()
        if "v7" in kind or "7x" in kind:
            return 2
    except Exception:
        pass
    return 1


def _mlp_softmax_kernel(x_ref, w1_ref, b1_ref, *rest, n_layer: int, stream: bool):
    """One batch-tile of the MLP forward (+softmax over dim=1).

    Weights/biases are full-array VMEM blocks shared across all grid steps
    (constant index_maps), except in `stream` mode where the hidden-weight
    stack stays in HBM and is streamed layer-by-layer (double-buffered DMA).
    Matmul operands are bf16, accumulation f32; elementwise math stays f32.
    """
    if n_layer > 0:
        if stream:
            wh_ref, bh_ref, wo_ref, bo_ref, o_ref, wbuf, sem = rest
        else:
            wh_ref, bh_ref, wo_ref, bo_ref, o_ref = rest
            wbuf = sem = None
    else:
        wo_ref, bo_ref, o_ref = rest
        wh_ref = bh_ref = wbuf = sem = None

    # Prefetch the first hidden-layer weight slab while fc1 runs (stream mode).
    if stream:
        pltpu.make_async_copy(wh_ref.at[0], wbuf.at[0], sem.at[0]).start()

    # fc1 + ReLU   (bf16 x bf16 -> f32 MXU accumulation)
    h = jnp.dot(x_ref[...], w1_ref[...], preferred_element_type=jnp.float32)
    h = jnp.maximum(h + b1_ref[...], 0.0)
    # TODO(synk): on v6e/v7x the bias-add/ReLU could stay bf16 (bf16 VPU) to
    # halve elementwise vreg traffic; kept f32 so one kernel also runs on v5e.

    # hidden layers fc2..fc{nLayer+1} + ReLU (static unrolled; n_layer is a
    # compile-time constant, matching the Python loop in TorchModel.forward)
    for i in range(n_layer):
        if stream:
            slot = i & 1
            pltpu.make_async_copy(wh_ref.at[i], wbuf.at[slot], sem.at[slot]).wait()
            if i + 1 < n_layer:   # overlap next layer's weight DMA with matmul
                pltpu.make_async_copy(wh_ref.at[i + 1], wbuf.at[1 - slot],
                                      sem.at[1 - slot]).start()
            w = wbuf[slot]
        else:
            w = wh_ref[i]
        h = jnp.dot(h.astype(jnp.bfloat16), w, preferred_element_type=jnp.float32)
        h = jnp.maximum(h + bh_ref[i], 0.0)

    # output layer
    logits = jnp.dot(h.astype(jnp.bfloat16), wo_ref[...],
                     preferred_element_type=jnp.float32) + bo_ref[...]

    # last_activation = softmax(dim=1).  Padded logit columns carry a -1e30
    # bias (and exactly-zero padded wo columns), so exp() underflows to 0
    # there and the padded softmax equals the true softmax on real columns.
    m = jnp.max(logits, axis=1, keepdims=True)
    e = jnp.exp(logits - m)
    denom = jnp.sum(e, axis=1, keepdims=True)
    o_ref[...] = (e * pl.reciprocal(denom, approx=True)).astype(o_ref.dtype)


def prepare_params(w1, b1, wh, bh, wo, bo, *, dtype=jnp.bfloat16):
    """One-time parameter prep: lane-pad feature dims and cast matmul operands.

    Call this ONCE (e.g. at init / after a weight update) and pass the result
    to torch_model_forward; the per-call jitted path then contains no param
    pad/convert HLOs.  Biases stay f32.  NOTE: the padded-softmax trick
    requires bo_p to stay f32 with -1e30 in padded columns and padded wo
    columns to stay exactly zero.
    """
    n_in, n_nodes = w1.shape
    n_out = wo.shape[1]
    n_in_p = _rup(n_in, LANE)
    n_nodes_p = _rup(n_nodes, LANE)
    n_out_p = _rup(n_out, LANE)

    w1_p = jnp.pad(w1, ((0, n_in_p - n_in), (0, n_nodes_p - n_nodes))).astype(dtype)
    b1_p = jnp.pad(b1, ((0, 0), (0, n_nodes_p - n_nodes)))
    wo_p = jnp.pad(wo, ((0, n_nodes_p - n_nodes), (0, n_out_p - n_out))).astype(dtype)
    bo_p = jnp.pad(bo, ((0, 0), (0, n_out_p - n_out)), constant_values=_NEG)

    if wh is not None:
        wh_p = jnp.pad(wh, ((0, 0),
                            (0, n_nodes_p - n_nodes),
                            (0, n_nodes_p - n_nodes))).astype(dtype)
        bh_p = jnp.pad(bh, ((0, 0), (0, 0), (0, n_nodes_p - n_nodes)))
    else:
        wh_p = bh_p = None
    return w1_p, b1_p, wh_p, bh_p, wo_p, bo_p


def torch_model_forward(x, w1_p, b1_p, wh_p, bh_p, wo_p, bo_p, *, n_layer,
                        n_out, n_nodes=None, num_cores=None,
                        max_tile_batch=4096, out_dtype=jnp.float32,
                        vmem_budget_bytes=24 * 1024 * 1024,
                        force_stream_hidden=False):
    """Run the batched Pallas kernel on pre-padded params; slice real output."""
    batch, n_in = x.shape
    n_in_p, n_nodes_p = w1_p.shape
    n_out_p = wo_p.shape[1]
    n_nodes_r = n_nodes if n_nodes is not None else n_nodes_p

    if num_cores is None:
        num_cores = _default_num_cores()

    # Grid steps: one per TensorCore (grid is a *serial* loop on single-TC
    # chips, ~0.35 us/step), splitting further only for very large batches.
    grid_steps = max(num_cores, pl.cdiv(batch, max_tile_batch))
    tile_batch = _rup(pl.cdiv(batch, grid_steps), SUBLANE)
    batch_p = tile_batch * grid_steps

    # Only the activations are padded/cast per call; params were prepared once.
    x_p = jnp.pad(x, ((0, batch_p - batch), (0, n_in_p - n_in))).astype(w1_p.dtype)

    wdt = w1_p.dtype.itemsize
    odt = jnp.dtype(out_dtype).itemsize
    wh_bytes = (wh_p.size * wh_p.dtype.itemsize) if n_layer > 0 else 0
    bh_bytes = (bh_p.size * bh_p.dtype.itemsize) if n_layer > 0 else 0
    resident = ((w1_p.size + wo_p.size) * wdt
                + (b1_p.size + bo_p.size) * 4 + bh_bytes
                + 2 * tile_batch * n_in_p * wdt       # double-buffered x tile
                + 2 * tile_batch * n_out_p * odt      # double-buffered out tile
                + 2 * tile_batch * n_nodes_p * 4)     # live activation slab
    stream = (force_stream_hidden
              or (resident + wh_bytes > vmem_budget_bytes)) and n_layer > 0

    vmem_est = resident + (2 * n_nodes_p * n_nodes_p * wdt if stream else wh_bytes)
    vmem_limit = None
    if vmem_est > 30 * 1024 * 1024:
        vmem_limit = min(int(vmem_est * 1.25), 60 * 1024 * 1024)

    in_specs = [
        pl.BlockSpec((tile_batch, n_in_p), lambda i: (i, 0)),   # x: tiled on batch
        pl.BlockSpec((n_in_p, n_nodes_p), lambda i: (0, 0)),    # params: constant
        pl.BlockSpec((1, n_nodes_p), lambda i: (0, 0)),         #   maps -> DMA'd once
    ]
    args = [x_p, w1_p, b1_p]
    scratch_shapes = []
    if n_layer > 0:
        if stream:
            # Hidden-weight stack too big for resident VMEM (e.g. v7x 64 MiB):
            # keep it in HBM and stream layer-by-layer, double-buffered.
            in_specs.append(pl.BlockSpec(memory_space=pl.ANY))
            scratch_shapes = [pltpu.VMEM((2, n_nodes_p, n_nodes_p), wh_p.dtype),
                              pltpu.SemaphoreType.DMA((2,))]
        else:
            in_specs.append(pl.BlockSpec((n_layer, n_nodes_p, n_nodes_p),
                                         lambda i: (0, 0, 0)))
        in_specs.append(pl.BlockSpec((n_layer, 1, n_nodes_p), lambda i: (0, 0, 0)))
        args += [wh_p, bh_p]
    in_specs += [
        pl.BlockSpec((n_nodes_p, n_out_p), lambda i: (0, 0)),
        pl.BlockSpec((1, n_out_p), lambda i: (0, 0)),
    ]
    args += [wo_p, bo_p]

    # Advisory cost estimate from the REAL (unpadded) dims.
    flops = 2 * batch * (n_in * n_nodes_r
                         + n_layer * n_nodes_r * n_nodes_r
                         + n_nodes_r * n_out)
    bytes_accessed = (batch * n_in * wdt
                      + n_in * n_nodes_r * wdt
                      + n_layer * n_nodes_r * n_nodes_r * wdt
                      + n_nodes_r * n_out * wdt
                      + (n_nodes_r * (n_layer + 1) + n_out) * 4
                      + batch * n_out * odt)
    cost = pl.CostEstimate(flops=int(flops),
                           transcendentals=int(batch * n_out),
                           bytes_accessed=int(bytes_accessed))

    out_p = pl.pallas_call(
        functools.partial(_mlp_softmax_kernel, n_layer=n_layer, stream=stream),
        out_shape=jax.ShapeDtypeStruct((batch_p, n_out_p), out_dtype),
        grid=(grid_steps,),
        in_specs=in_specs,
        out_specs=pl.BlockSpec((tile_batch, n_out_p), lambda i: (i, 0)),
        scratch_shapes=scratch_shapes,
        compiler_params=pltpu.CompilerParams(
            dimension_semantics=("parallel",),   # shards across both TCs on v7x
            vmem_limit_bytes=vmem_limit),
        cost_estimate=cost,
    )(*args)

    return out_p[:batch, :n_out]


def init_params(key, n_inputs, n_outputs, n_layer, n_nodes):
    """Uniform init (like torch's default Linear init).

    Weights stored as [in_features, out_features] (transposed vs torch), so
    the kernel computes y = x @ W + b.  Biases are [1, out]; hidden biases are
    stacked as [n_layer, 1, n_nodes].
    """
    keys = jax.random.split(key, 2 * (n_layer + 2))

    def lin(kw, kb, fan_in, fan_out):
        bound = 1.0 / (fan_in ** 0.5)
        w = jax.random.uniform(kw, (fan_in, fan_out), jnp.float32, -bound, bound)
        b = jax.random.uniform(kb, (1, fan_out), jnp.float32, -bound, bound)
        return w, b

    w1, b1 = lin(keys[0], keys[1], n_inputs, n_nodes)
    if n_layer > 0:
        ws, bs = [], []
        for i in range(n_layer):
            w, b = lin(keys[2 + 2 * i], keys[3 + 2 * i], n_nodes, n_nodes)
            ws.append(w)
            bs.append(b)
        wh = jnp.stack(ws, axis=0)   # [n_layer, n_nodes, n_nodes]
        bh = jnp.stack(bs, axis=0)   # [n_layer, 1, n_nodes]
    else:
        wh = bh = None
    wo, bo = lin(keys[-2], keys[-1], n_nodes, n_outputs)
    return w1, b1, wh, bh, wo, bo


def reference_forward(x, w1, b1, wh, bh, wo, bo, n_layer):
    """Pure-JAX reference with the same bf16-operand / f32-accum math."""
    h = jnp.dot(x.astype(jnp.bfloat16), w1.astype(jnp.bfloat16),
                preferred_element_type=jnp.float32) + b1
    h = jnp.maximum(h, 0.0)
    for i in range(n_layer):
        h = jnp.dot(h.astype(jnp.bfloat16), wh[i].astype(jnp.bfloat16),
                    preferred_element_type=jnp.float32) + bh[i]
        h = jnp.maximum(h, 0.0)
    logits = jnp.dot(h.astype(jnp.bfloat16), wo.astype(jnp.bfloat16),
                     preferred_element_type=jnp.float32) + bo
    return jax.nn.softmax(logits, axis=1)


if __name__ == "__main__":
    # Small MLP policy head; batch large enough to exercise the batch tiling.
    batch = 256
    n_inputs = 32
    n_nodes = 32
    n_outputs = 8
    n_layer = 2  # extra hidden layers (fc2, fc3)

    key = jax.random.PRNGKey(0)
    k_x, k_p = jax.random.split(key)

    x = jax.random.normal(k_x, (batch, n_inputs), jnp.float32)
    w1, b1, wh, bh, wo, bo = init_params(k_p, n_inputs, n_outputs, n_layer, n_nodes)

    # One-time parameter preparation (padding + bf16 cast) -> hoisted out of
    # the per-call jitted path.
    params_p = prepare_params(w1, b1, wh, bh, wo, bo)

    fwd = jax.jit(functools.partial(torch_model_forward, n_layer=n_layer,
                                    n_out=n_outputs, n_nodes=n_nodes))
    out = jax.block_until_ready(fwd(x, *params_p))

    ref = reference_forward(x, w1, b1, wh, bh, wo, bo, n_layer)
    assert out.shape == (batch, n_outputs)
    assert jnp.allclose(out, ref, atol=5e-3, rtol=5e-3), "mismatch vs JAX reference"

    # Exercise the streamed hidden-weight path (auto-enabled when the wh stack
    # would blow the VMEM budget, e.g. large n_nodes/n_layer on v7x 64 MiB).
    fwd_s = jax.jit(functools.partial(torch_model_forward, n_layer=n_layer,
                                      n_out=n_outputs, n_nodes=n_nodes,
                                      force_stream_hidden=True))
    out_s = jax.block_until_ready(fwd_s(x, *params_p))
    assert jnp.allclose(out_s, ref, atol=5e-3, rtol=5e-3), "mismatch (streamed wh)"

    # Also exercise the nLayer == 0 path (no hidden-stack operands or specs).
    w1_0, b1_0, _, _, wo_0, bo_0 = init_params(k_p, n_inputs, n_outputs, 0, n_nodes)
    params0_p = prepare_params(w1_0, b1_0, None, None, wo_0, bo_0)
    fwd0 = jax.jit(functools.partial(torch_model_forward, n_layer=0,
                                     n_out=n_outputs, n_nodes=n_nodes))
    out0 = jax.block_until_ready(fwd0(x, *params0_p))
    ref0 = reference_forward(x, w1_0, b1_0, None, None, wo_0, bo_0, 0)
    assert jnp.allclose(out0, ref0, atol=5e-3, rtol=5e-3), "mismatch (nLayer=0)"

    print("KERNEL_OK")
</pallas_src>

<mosaic_0001>
module attributes {stable_mosaic.version = 11 : i64} {
  func.func @_mlp_softmax_kernel(%arg0: i32, %arg1: memref<256x128xbf16, #tpu.memory_space<vmem>>, %arg2: memref<128x128xbf16, #tpu.memory_space<vmem>>, %arg3: memref<1x128xf32, #tpu.memory_space<vmem>>, %arg4: memref<2x128x128xbf16, #tpu.memory_space<vmem>>, %arg5: memref<2x1x128xf32, #tpu.memory_space<vmem>>, %arg6: memref<128x128xbf16, #tpu.memory_space<vmem>>, %arg7: memref<1x128xf32, #tpu.memory_space<vmem>>, %arg8: memref<256x128xf32, #tpu.memory_space<vmem>>) attributes {dimension_semantics = [#tpu.dimension_semantics<parallel>], iteration_bounds = array<i64: 1>, scalar_prefetch = 0 : i64, scratch_operands = 0 : i64, tpu.core_type = #tpu.core_type<tc>, window_params = [{transform_indices = @transform_0, window_bounds = array<i64: 256, 128>}, {pipeline_mode = #tpu.pipeline_mode<synchronous>, transform_indices = @transform_1, window_bounds = array<i64: 128, 128>}, {pipeline_mode = #tpu.pipeline_mode<synchronous>, transform_indices = @transform_2, window_bounds = array<i64: 1, 128>}, {pipeline_mode = #tpu.pipeline_mode<synchronous>, transform_indices = @transform_3, window_bounds = array<i64: 2, 128, 128>}, {pipeline_mode = #tpu.pipeline_mode<synchronous>, transform_indices = @transform_4, window_bounds = array<i64: 2, 1, 128>}, {pipeline_mode = #tpu.pipeline_mode<synchronous>, transform_indices = @transform_5, window_bounds = array<i64: 128, 128>}, {pipeline_mode = #tpu.pipeline_mode<synchronous>, transform_indices = @transform_6, window_bounds = array<i64: 1, 128>}, {transform_indices = @transform_7, window_bounds = array<i64: 256, 128>}]} {
    %c0 = arith.constant 0 : index
    %c0_0 = arith.constant 0 : index
    %0 = vector.load %arg1[%c0, %c0_0] : memref<256x128xbf16, #tpu.memory_space<vmem>>, vector<256x128xbf16>
    %c0_1 = arith.constant 0 : index
    %c0_2 = arith.constant 0 : index
    %1 = vector.load %arg2[%c0_1, %c0_2] : memref<128x128xbf16, #tpu.memory_space<vmem>>, vector<128x128xbf16>
    %cst = arith.constant dense<0.000000e+00> : vector<256x128xf32>
    %2 = tpu.matmul %0, %1, %cst {dimension_numbers = #tpu.dot_dimension_numbers<[1], [0], [0], [1], [0, 0, 1, 1], [], []>} : vector<256x128xbf16>, vector<128x128xbf16>, vector<256x128xf32> -> vector<256x128xf32>
    %c0_3 = arith.constant 0 : index
    %c0_4 = arith.constant 0 : index
    %3 = vector.load %arg3[%c0_3, %c0_4] : memref<1x128xf32, #tpu.memory_space<vmem>>, vector<1x128xf32>
    %4 = vector.broadcast %3 : vector<1x128xf32> to vector<256x128xf32>
    %5 = arith.addf %2, %4 : vector<256x128xf32>
    %cst_5 = arith.constant 0.000000e+00 : f32
    %6 = vector.broadcast %cst_5 : f32 to vector<256x128xf32>
    %7 = arith.maximumf %5, %6 : vector<256x128xf32>
    %c0_6 = arith.constant 0 : index
    %c0_7 = arith.constant 0 : index
    %c0_8 = arith.constant 0 : index
    %8 = vector.load %arg4[%c0_6, %c0_7, %c0_8] : memref<2x128x128xbf16, #tpu.memory_space<vmem>>, vector<1x128x128xbf16>
    %9 = vector.shape_cast %8 : vector<1x128x128xbf16> to vector<128x128xbf16>
    %10 = arith.truncf %7 : vector<256x128xf32> to vector<256x128xbf16>
    %cst_9 = arith.constant dense<0.000000e+00> : vector<256x128xf32>
    %11 = tpu.matmul %10, %9, %cst_9 {dimension_numbers = #tpu.dot_dimension_numbers<[1], [0], [0], [1], [0, 0, 1, 1], [], []>} : vector<256x128xbf16>, vector<128x128xbf16>, vector<256x128xf32> -> vector<256x128xf32>
    %c0_10 = arith.constant 0 : index
    %c0_11 = arith.constant 0 : index
    %c0_12 = arith.constant 0 : index
    %12 = vector.load %arg5[%c0_10, %c0_11, %c0_12] : memref<2x1x128xf32, #tpu.memory_space<vmem>>, vector<1x1x128xf32>
    %13 = vector.shape_cast %12 : vector<1x1x128xf32> to vector<1x128xf32>
    %14 = vector.broadcast %13 : vector<1x128xf32> to vector<256x128xf32>
    %15 = arith.addf %11, %14 : vector<256x128xf32>
    %cst_13 = arith.constant 0.000000e+00 : f32
    %16 = vector.broadcast %cst_13 : f32 to vector<256x128xf32>
    %17 = arith.maximumf %15, %16 : vector<256x128xf32>
    %c1 = arith.constant 1 : index
    %c0_14 = arith.constant 0 : index
    %c0_15 = arith.constant 0 : index
    %18 = vector.load %arg4[%c1, %c0_14, %c0_15] : memref<2x128x128xbf16, #tpu.memory_space<vmem>>, vector<1x128x128xbf16>
    %19 = vector.shape_cast %18 : vector<1x128x128xbf16> to vector<128x128xbf16>
    %20 = arith.truncf %17 : vector<256x128xf32> to vector<256x128xbf16>
    %cst_16 = arith.constant dense<0.000000e+00> : vector<256x128xf32>
    %21 = tpu.matmul %20, %19, %cst_16 {dimension_numbers = #tpu.dot_dimension_numbers<[1], [0], [0], [1], [0, 0, 1, 1], [], []>} : vector<256x128xbf16>, vector<128x128xbf16>, vector<256x128xf32> -> vector<256x128xf32>
    %c1_17 = arith.constant 1 : index
    %c0_18 = arith.constant 0 : index
    %c0_19 = arith.constant 0 : index
    %22 = vector.load %arg5[%c1_17, %c0_18, %c0_19] : memref<2x1x128xf32, #tpu.memory_space<vmem>>, vector<1x1x128xf32>
    %23 = vector.shape_cast %22 : vector<1x1x128xf32> to vector<1x128xf32>
    %24 = vector.broadcast %23 : vector<1x128xf32> to vector<256x128xf32>
    %25 = arith.addf %21, %24 : vector<256x128xf32>
    %cst_20 = arith.constant 0.000000e+00 : f32
    %26 = vector.broadcast %cst_20 : f32 to vector<256x128xf32>
    %27 = arith.maximumf %25, %26 : vector<256x128xf32>
    %28 = arith.truncf %27 : vector<256x128xf32> to vector<256x128xbf16>
    %c0_21 = arith.constant 0 : index
    %c0_22 = arith.constant 0 : index
    %29 = vector.load %arg6[%c0_21, %c0_22] : memref<128x128xbf16, #tpu.memory_space<vmem>>, vector<128x128xbf16>
    %cst_23 = arith.constant dense<0.000000e+00> : vector<256x128xf32>
    %30 = tpu.matmul %28, %29, %cst_23 {dimension_numbers = #tpu.dot_dimension_numbers<[1], [0], [0], [1], [0, 0, 1, 1], [], []>} : vector<256x128xbf16>, vector<128x128xbf16>, vector<256x128xf32> -> vector<256x128xf32>
    %c0_24 = arith.constant 0 : index
    %c0_25 = arith.constant 0 : index
    %31 = vector.load %arg7[%c0_24, %c0_25] : memref<1x128xf32, #tpu.memory_space<vmem>>, vector<1x128xf32>
    %32 = vector.broadcast %31 : vector<1x128xf32> to vector<256x128xf32>
    %33 = arith.addf %30, %32 : vector<256x128xf32>
    %cst_26 = arith.constant dense<0xFF800000> : vector<256xf32>
    %34 = vector.multi_reduction <maximumf>, %33, %cst_26 [1] : vector<256x128xf32> to vector<256xf32>
    %35 = vector.shape_cast %34 : vector<256xf32> to vector<256x1xf32>
    %36 = vector.broadcast %35 : vector<256x1xf32> to vector<256x128xf32>
    %37 = arith.subf %33, %36 : vector<256x128xf32>
    %38 = math.exp %37 : vector<256x128xf32>
    %cst_27 = arith.constant dense<0.000000e+00> : vector<256xf32>
    %39 = vector.multi_reduction <add>, %38, %cst_27 [1] : vector<256x128xf32> to vector<256xf32>
    %40 = vector.shape_cast %39 : vector<256xf32> to vector<256x1xf32>
    %41 = tpu.reciprocal %40 {approx = true} : vector<256x1xf32> -> vector<256x1xf32>
    %42 = vector.broadcast %41 : vector<256x1xf32> to vector<256x128xf32>
    %43 = arith.mulf %38, %42 : vector<256x128xf32>
    %c0_28 = arith.constant 0 : index
    %c0_29 = arith.constant 0 : index
    %44 = vector.load %arg8[%c0_28, %c0_29] : memref<256x128xf32, #tpu.memory_space<vmem>>, vector<256x128xf32>
    tpu.vector_store %arg8[%c0_28, %c0_29], %43 {strides = array<i32>} : memref<256x128xf32, #tpu.memory_space<vmem>>, vector<256x128xf32>,
    return
  }
  func.func @transform_0(%arg0: i32) -> (i32, i32) {
    %c0_i32 = arith.constant 0 : i32
    %c0_i32_0 = arith.constant 0 : i32
    return %arg0, %c0_i32 : i32, i32
  }
  func.func @transform_1(%arg0: i32) -> (i32, i32) {
    %c0_i32 = arith.constant 0 : i32
    %c0_i32_0 = arith.constant 0 : i32
    %c0_i32_1 = arith.constant 0 : i32
    return %c0_i32, %c0_i32_0 : i32, i32
  }
  func.func @transform_2(%arg0: i32) -> (i32, i32) {
    %c0_i32 = arith.constant 0 : i32
    %c0_i32_0 = arith.constant 0 : i32
    %c0_i32_1 = arith.constant 0 : i32
    return %c0_i32, %c0_i32_0 : i32, i32
  }
  func.func @transform_3(%arg0: i32) -> (i32, i32, i32) {
    %c0_i32 = arith.constant 0 : i32
    %c0_i32_0 = arith.constant 0 : i32
    %c0_i32_1 = arith.constant 0 : i32
    %c0_i32_2 = arith.constant 0 : i32
    return %c0_i32, %c0_i32_0, %c0_i32_1 : i32, i32, i32
  }
  func.func @transform_4(%arg0: i32) -> (i32, i32, i32) {
    %c0_i32 = arith.constant 0 : i32
    %c0_i32_0 = arith.constant 0 : i32
    %c0_i32_1 = arith.constant 0 : i32
    %c0_i32_2 = arith.constant 0 : i32
    return %c0_i32, %c0_i32_0, %c0_i32_1 : i32, i32, i32
  }
  func.func @transform_5(%arg0: i32) -> (i32, i32) {
    %c0_i32 = arith.constant 0 : i32
    %c0_i32_0 = arith.constant 0 : i32
    %c0_i32_1 = arith.constant 0 : i32
    return %c0_i32, %c0_i32_0 : i32, i32
  }
  func.func @transform_6(%arg0: i32) -> (i32, i32) {
    %c0_i32 = arith.constant 0 : i32
    %c0_i32_0 = arith.constant 0 : i32
    %c0_i32_1 = arith.constant 0 : i32
    return %c0_i32, %c0_i32_0 : i32, i32
  }
  func.func @transform_7(%arg0: i32) -> (i32, i32) {
    %c0_i32 = arith.constant 0 : i32
    %c0_i32_0 = arith.constant 0 : i32
    return %arg0, %c0_i32 : i32, i32
  }
}

</mosaic_0001>

<llo_original>
// kernel: torch_model_forward.1
$region0: #{torch_model_forward.1}
  #allocation0 [shape = 'u32[]', space=smem, size = 0x4, offset = 0x4, fixed_abs, tag = 'smem constant byte address 0x4 - core index']
  #allocation1 [shape = 'u32[144,128]{1,0:T(1,128)}', space=vmem, size = 0x12000, scoped, tag = 'internal scratch']
  %s0 = inlined_call_operand.vmem [shape: bf16[256,128], index: 0, kind: input, shape index: {}]
  %s1 = inlined_call_operand.vmem [shape: bf16[128,128], index: 1, kind: input, shape index: {}]
  %s2 = inlined_call_operand.vmem [shape: f32[1,128], index: 2, kind: input, shape index: {}]
  %s3 = inlined_call_operand.vmem [shape: bf16[2,128,128], index: 3, kind: input, shape index: {}]
  %s4 = inlined_call_operand.vmem [shape: f32[2,1,128], index: 4, kind: input, shape index: {}]
  %s5 = inlined_call_operand.vmem [shape: bf16[128,128], index: 5, kind: input, shape index: {}]
  %s6 = inlined_call_operand.vmem [shape: f32[1,128], index: 6, kind: input, shape index: {}]
  %s7 = inlined_call_operand.vmem [shape: f32[256,128], index: 7, kind: output, shape index: {}]
  %s8 = sld [smem:[#allocation0]]
  $region38: #{torch_model_forward.1} parent=0
    _
  %s10 = ssub.s32 1, %s8
  %s11 = scalar_select 0, %s10, %s8
  // Predicated region
  $region2: #{torch_model_forward.1} parent=0 // pred_check
    _
  $region3: #{torch_model_forward.1} parent=0 // pred_check_branch
    %13 = sbr.rel (0) target = $region5
  $region4: #{torch_model_forward.1} parent=0 // pred_region
    _
  $region5: #{torch_model_forward.1} parent=0 // pred_fallthru
    _
  // Predicated region
  $region6: #{torch_model_forward.1} parent=0 // pred_check
    _
  $region7: #{torch_model_forward.1} parent=0 // pred_check_branch
    %15 = sbr.rel (0) target = $region9
  $region8: #{torch_model_forward.1} parent=0 // pred_region
    _
  $region9: #{torch_model_forward.1} parent=0 // pred_fallthru
    _
  // Predicated region
  $region10: #{torch_model_forward.1} parent=0 // pred_check
    _
  $region11: #{torch_model_forward.1} parent=0 // pred_check_branch
    %17 = sbr.rel (0) target = $region13
  $region12: #{torch_model_forward.1} parent=0 // pred_region
    _
  $region13: #{torch_model_forward.1} parent=0 // pred_fallthru
    _
  // Predicated region
  $region14: #{torch_model_forward.1} parent=0 // pred_check
    _
  $region15: #{torch_model_forward.1} parent=0 // pred_check_branch
    %19 = sbr.rel (0) target = $region17
  $region16: #{torch_model_forward.1} parent=0 // pred_region
    _
  $region17: #{torch_model_forward.1} parent=0 // pred_fallthru
    _
  // Predicated region
  $region18: #{torch_model_forward.1} parent=0 // pred_check
    _
  $region19: #{torch_model_forward.1} parent=0 // pred_check_branch
    %21 = sbr.rel (0) target = $region21
  $region20: #{torch_model_forward.1} parent=0 // pred_region
    _
  $region21: #{torch_model_forward.1} parent=0 // pred_fallthru
    _
  // Predicated region
  $region22: #{torch_model_forward.1} parent=0 // pred_check
    _
  $region23: #{torch_model_forward.1} parent=0 // pred_check_branch
    %23 = sbr.rel (0) target = $region25
  $region24: #{torch_model_forward.1} parent=0 // pred_region
    _
  $region25: #{torch_model_forward.1} parent=0 // pred_fallthru
    _
  // Predicated region
  $region26: #{torch_model_forward.1} parent=0 // pred_check
    _
  $region27: #{torch_model_forward.1} parent=0 // pred_check_branch
    %25 = sbr.rel (0) target = $region29
  $region28: #{torch_model_forward.1} parent=0 // pred_region
    _
  $region29: #{torch_model_forward.1} parent=0 // pred_fallthru
    _
  %v27 = vld [vmem:[%s0] sm:$0xf]
  %v28 = vld [vmem:[%s0 + $0x4] sm:$0xf]
  %v29 = vld [vmem:[%s0 + $0x8] sm:$0xf]
  %v30 = vld [vmem:[%s0 + $0xc] sm:$0xf]
  %v31 = vld [vmem:[%s0 + $0x10] sm:$0xf]
  %v32 = vld [vmem:[%s0 + $0x14] sm:$0xf]
  %v33 = vld [vmem:[%s0 + $0x18] sm:$0xf]
  %v34 = vld [vmem:[%s0 + $0x1c] sm:$0xf]
  %v35 = vld [vmem:[%s0 + $0x20] sm:$0xf]
  %v36 = vld [vmem:[%s0 + $0x24] sm:$0xf]
  %v37 = vld [vmem:[%s0 + $0x28] sm:$0xf]
  %v38 = vld [vmem:[%s0 + $0x2c] sm:$0xf]
  %v39 = vld [vmem:[%s0 + $0x30] sm:$0xf]
  %v40 = vld [vmem:[%s0 + $0x34] sm:$0xf]
  %v41 = vld [vmem:[%s0 + $0x38] sm:$0xf]
  %v42 = vld [vmem:[%s0 + $0x3c] sm:$0xf]
  %v43 = vld [vmem:[%s0 + $0x40] sm:$0xf]
  %v44 = vld [vmem:[%s0 + $0x44] sm:$0xf]
  %v45 = vld [vmem:[%s0 + $0x48] sm:$0xf]
  %v46 = vld [vmem:[%s0 + $0x4c] sm:$0xf]
  %v47 = vld [vmem:[%s0 + $0x50] sm:$0xf]
  %v48 = vld [vmem:[%s0 + $0x54] sm:$0xf]
  %v49 = vld [vmem:[%s0 + $0x58] sm:$0xf]
  %v50 = vld [vmem:[%s0 + $0x5c] sm:$0xf]
  %v51 = vld [vmem:[%s0 + $0x60] sm:$0xf]
  %v52 = vld [vmem:[%s0 + $0x64] sm:$0xf]
  %v53 = vld [vmem:[%s0 + $0x68] sm:$0xf]
  %v54 = vld [vmem:[%s0 + $0x6c] sm:$0xf]
  %v55 = vld [vmem:[%s0 + $0x70] sm:$0xf]
  %v56 = vld [vmem:[%s0 + $0x74] sm:$0xf]
  %v57 = vld [vmem:[%s0 + $0x78] sm:$0xf]
  %v58 = vld [vmem:[%s0 + $0x7c] sm:$0xf]
  %v59 = vld [vmem:[%s1] sm:$0xf]
  %v60 = vld [vmem:[%s1 + $0x4] sm:$0xf]
  %v61 = vld [vmem:[%s1 + $0x8] sm:$0xf]
  %v62 = vld [vmem:[%s1 + $0xc] sm:$0xf]
  %v63 = vld [vmem:[%s1 + $0x10] sm:$0xf]
  %v64 = vld [vmem:[%s1 + $0x14] sm:$0xf]
  %v65 = vld [vmem:[%s1 + $0x18] sm:$0xf]
  %v66 = vld [vmem:[%s1 + $0x1c] sm:$0xf]
  %v67 = vld [vmem:[%s1 + $0x20] sm:$0xf]
  %v68 = vld [vmem:[%s1 + $0x24] sm:$0xf]
  %v69 = vld [vmem:[%s1 + $0x28] sm:$0xf]
  %v70 = vld [vmem:[%s1 + $0x2c] sm:$0xf]
  %v71 = vld [vmem:[%s1 + $0x30] sm:$0xf]
  %v72 = vld [vmem:[%s1 + $0x34] sm:$0xf]
  %v73 = vld [vmem:[%s1 + $0x38] sm:$0xf]
  %v74 = vld [vmem:[%s1 + $0x3c] sm:$0xf]
  %v75 = vld [vmem:[%s2] sm:$0x1]
  %v77 = vlaneseq
  %v78 = vshrl.u32 %v77, 7
  %v79 = vsub.s32 0, %v78
  %v80 = vrot.slane %v75, %v79
  %v114 = vunpack.c.l.b16 %v27
  %v115 = vunpack.c.l.b16 %v28
  %v116 = vunpack.c.l.b16 %v29
  %v117 = vunpack.c.l.b16 %v30
  %v118 = vunpack.c.l.b16 %v31
  %v119 = vunpack.c.l.b16 %v32
  %v120 = vunpack.c.l.b16 %v33
  %v121 = vunpack.c.l.b16 %v34
  %v122 = vunpack.c.l.b16 %v35
  %v123 = vunpack.c.l.b16 %v36
  %v124 = vunpack.c.l.b16 %v37
  %v125 = vunpack.c.l.b16 %v38
  %v126 = vunpack.c.l.b16 %v39
  %v127 = vunpack.c.l.b16 %v40
  %v128 = vunpack.c.l.b16 %v41
  %v129 = vunpack.c.l.b16 %v42
  %v130 = vunpack.c.l.b16 %v43
  %v131 = vunpack.c.l.b16 %v44
  %v132 = vunpack.c.l.b16 %v45
  %v133 = vunpack.c.l.b16 %v46
  %v134 = vunpack.c.l.b16 %v47
  %v135 = vunpack.c.l.b16 %v48
  %v136 = vunpack.c.l.b16 %v49
  %v137 = vunpack.c.l.b16 %v50
  %v138 = vunpack.c.l.b16 %v51
  %v139 = vunpack.c.l.b16 %v52
  %v140 = vunpack.c.l.b16 %v53
  %v141 = vunpack.c.l.b16 %v54
  %v142 = vunpack.c.l.b16 %v55
  %v143 = vunpack.c.l.b16 %v56
  %v144 = vunpack.c.l.b16 %v57
  %v145 = vunpack.c.l.b16 %v58
  %v146 = vpack.c.b16 %v115, %v114
  %v147 = vpack.c.b16 %v117, %v116
  %v148 = vpack.c.b16 %v119, %v118
  %v149 = vpack.c.b16 %v121, %v120
  %v150 = vpack.c.b16 %v123, %v122
  %v151 = vpack.c.b16 %v125, %v124
  %v152 = vpack.c.b16 %v127, %v126
  %v153 = vpack.c.b16 %v129, %v128
  %v154 = vpack.c.b16 %v131, %v130
  %v155 = vpack.c.b16 %v133, %v132
  %v156 = vpack.c.b16 %v135, %v134
  %v157 = vpack.c.b16 %v137, %v136
  %v158 = vpack.c.b16 %v139, %v138
  %v159 = vpack.c.b16 %v141, %v140
  %v160 = vpack.c.b16 %v143, %v142
  %v161 = vpack.c.b16 %v145, %v144
  %v194 = vunpack.c.l.b16 %v59
  %v195 = vunpack.c.l.b16 %v60
  %v196 = vunpack.c.l.b16 %v61
  %v197 = vunpack.c.l.b16 %v62
  %v198 = vunpack.c.l.b16 %v63
  %v199 = vunpack.c.l.b16 %v64
  %v200 = vunpack.c.l.b16 %v65
  %v201 = vunpack.c.l.b16 %v66
  %v202 = vunpack.c.l.b16 %v67
  %v203 = vunpack.c.l.b16 %v68
  %v204 = vunpack.c.l.b16 %v69
  %v205 = vunpack.c.l.b16 %v70
  %v206 = vunpack.c.l.b16 %v71
  %v207 = vunpack.c.l.b16 %v72
  %v208 = vunpack.c.l.b16 %v73
  %v209 = vunpack.c.l.b16 %v74
  %v210 = vpack.c.b16 %v195, %v194
  %v211 = vpack.c.b16 %v197, %v196
  %v212 = vpack.c.b16 %v199, %v198
  %v213 = vpack.c.b16 %v201, %v200
  %v214 = vpack.c.b16 %v203, %v202
  %v215 = vpack.c.b16 %v205, %v204
  %v216 = vpack.c.b16 %v207, %v206
  %v217 = vpack.c.b16 %v209, %v208
  %226 = vmatprep.subr.bf16.mxu0 0
  %227 = vmatpush1.bf16.msra.mxu0 %v210
  %228 = vmatprep.subr.bf16.mxu0 0
  %229 = vmatpush1.bf16.msra.mxu0 %v211
  %230 = vmatprep.subr.bf16.mxu0 0
  %231 = vmatpush1.bf16.msra.mxu0 %v212
  %232 = vmatprep.subr.bf16.mxu0 0
  %233 = vmatpush1.bf16.msra.mxu0 %v213
  %234 = vmatprep.subr.bf16.mxu0 0
  %235 = vmatpush1.bf16.msra.mxu0 %v214
  %236 = vmatprep.subr.bf16.mxu0 0
  %237 = vmatpush1.bf16.msra.mxu0 %v215
  %238 = vmatprep.subr.bf16.mxu0 0
  %239 = vmatpush1.bf16.msra.mxu0 %v216
  %240 = vmatprep.subr.bf16.mxu0 0
  %241 = vmatpush1.bf16.msra.mxu0 %v217
  %242 = vmatprep.subr.bf16.mxu0 0
  %243 = vmatpush1.bf16.msra.mxu0 0
  %244 = vmatprep.subr.bf16.mxu0 0
  %245 = vmatpush1.bf16.msra.mxu0 0
  %246 = vmatprep.subr.bf16.mxu0 0
  %247 = vmatpush1.bf16.msra.mxu0 0
  %248 = vmatprep.subr.bf16.mxu0 0
  %249 = vmatpush1.bf16.msra.mxu0 0
  %250 = vmatprep.subr.bf16.mxu0 0
  %251 = vmatpush1.bf16.msra.mxu0 0
  %252 = vmatprep.subr.bf16.mxu0 0
  %253 = vmatpush1.bf16.msra.mxu0 0
  %254 = vmatprep.subr.bf16.mxu0 0
  %255 = vmatpush1.bf16.msra.mxu0 0
  %256 = vmatprep.subr.bf16.mxu0 0
  %257 = vmatpush1.bf16.msra.mxu0 0
  %258 = vmatprep.mubr.bf16.mxu0 0
  %259 = vmatmul.mubr.bf16.gmra.mrb[0].mxu0 %v146
  %v260 = vpop.f32.mrb[0].mxu0
  %v261 = vadd.f32 %v80, %v260
  %v262 = vpop.f32.mrb[0].mxu0
  %v263 = vpop.f32.mrb[0].mxu0
  %v264 = vadd.f32 %v80, %v263
  %v265 = vpop.f32.mrb[0].mxu0
  %266 = vmatprep.mubr.bf16.mxu0 0
  %267 = vmatmul.mubr.bf16.gmra.mrb[0].mxu0 %v147
  %v268 = vpop.f32.mrb[0].mxu0
  %v269 = vadd.f32 %v80, %v268
  %v270 = vpop.f32.mrb[0].mxu0
  %v271 = vpop.f32.mrb[0].mxu0
  %v272 = vadd.f32 %v80, %v271
  %v273 = vpop.f32.mrb[0].mxu0
  %274 = vmatprep.mubr.bf16.mxu0 0
  %275 = vmatmul.mubr.bf16.gmra.mrb[0].mxu0 %v148
  %v276 = vpop.f32.mrb[0].mxu0
  %v277 = vadd.f32 %v80, %v276
  %v278 = vpop.f32.mrb[0].mxu0
  %v279 = vpop.f32.mrb[0].mxu0
  %v280 = vadd.f32 %v80, %v279
  %v281 = vpop.f32.mrb[0].mxu0
  %282 = vmatprep.mubr.bf16.mxu0 0
  %283 = vmatmul.mubr.bf16.gmra.mrb[0].mxu0 %v149
  %v284 = vpop.f32.mrb[0].mxu0
  %v285 = vadd.f32 %v80, %v284
  %v286 = vpop.f32.mrb[0].mxu0
  %v287 = vpop.f32.mrb[0].mxu0
  %v288 = vadd.f32 %v80, %v287
  %v289 = vpop.f32.mrb[0].mxu0
  %290 = vmatprep.mubr.bf16.mxu0 0
  %291 = vmatmul.mubr.bf16.gmra.mrb[0].mxu0 %v150
  %v292 = vpop.f32.mrb[0].mxu0
  %v293 = vadd.f32 %v80, %v292
  %v294 = vpop.f32.mrb[0].mxu0
  %v295 = vpop.f32.mrb[0].mxu0
  %v296 = vadd.f32 %v80, %v295
  %v297 = vpop.f32.mrb[0].mxu0
  %298 = vmatprep.mubr.bf16.mxu0 0
  %299 = vmatmul.mubr.bf16.gmra.mrb[0].mxu0 %v151
  %v300 = vpop.f32.mrb[0].mxu0
  %v301 = vadd.f32 %v80, %v300
  %v302 = vpop.f32.mrb[0].mxu0
  %v303 = vpop.f32.mrb[0].mxu0
  %v304 = vadd.f32 %v80, %v303
  %v305 = vpop.f32.mrb[0].mxu0
  %306 = vmatprep.mubr.bf16.mxu0 0
  %307 = vmatmul.mubr.bf16.gmra.mrb[0].mxu0 %v152
  %v308 = vpop.f32.mrb[0].mxu0
  %v309 = vadd.f32 %v80, %v308
  %v310 = vpop.f32.mrb[0].mxu0
  %v311 = vpop.f32.mrb[0].mxu0
  %v312 = vadd.f32 %v80, %v311
  %v313 = vpop.f32.mrb[0].mxu0
  %314 = vmatprep.mubr.bf16.mxu0 0
  %315 = vmatmul.mubr.bf16.gmra.mrb[0].mxu0 %v153
  %v316 = vpop.f32.mrb[0].mxu0
  %v317 = vadd.f32 %v80, %v316
  %v318 = vpop.f32.mrb[0].mxu0
  %v319 = vpop.f32.mrb[0].mxu0
  %v320 = vadd.f32 %v80, %v319
  %v321 = vpop.f32.mrb[0].mxu0
  %322 = vmatprep.mubr.bf16.mxu0 0
  %323 = vmatmul.mubr.bf16.gmra.mrb[0].mxu0 %v154
  %v324 = vpop.f32.mrb[0].mxu0
  %v325 = vadd.f32 %v80, %v324
  %v326 = vpop.f32.mrb[0].mxu0
  %v327 = vpop.f32.mrb[0].mxu0
  %v328 = vadd.f32 %v80, %v327
  %v329 = vpop.f32.mrb[0].mxu0
  %330 = vmatprep.mubr.bf16.mxu0 0
  %331 = vmatmul.mubr.bf16.gmra.mrb[0].mxu0 %v155
  %v332 = vpop.f32.mrb[0].mxu0
  %v333 = vadd.f32 %v80, %v332
  %v334 = vpop.f32.mrb[0].mxu0
  %v335 = vpop.f32.mrb[0].mxu0
  %v336 = vadd.f32 %v80, %v335
  %v337 = vpop.f32.mrb[0].mxu0
  %338 = vmatprep.mubr.bf16.mxu0 0
  %339 = vmatmul.mubr.bf16.gmra.mrb[0].mxu0 %v156
  %v340 = vpop.f32.mrb[0].mxu0
  %v341 = vadd.f32 %v80, %v340
  %v342 = vpop.f32.mrb[0].mxu0
  %v343 = vpop.f32.mrb[0].mxu0
  %v344 = vadd.f32 %v80, %v343
  %v345 = vpop.f32.mrb[0].mxu0
  %346 = vmatprep.mubr.bf16.mxu0 0
  %347 = vmatmul.mubr.bf16.gmra.mrb[0].mxu0 %v157
  %v348 = vpop.f32.mrb[0].mxu0
  %v349 = vadd.f32 %v80, %v348
  %v350 = vpop.f32.mrb[0].mxu0
  %v351 = vpop.f32.mrb[0].mxu0
  %v352 = vadd.f32 %v80, %v351
  %v353 = vpop.f32.mrb[0].mxu0
  %354 = vmatprep.mubr.bf16.mxu0 0
  %355 = vmatmul.mubr.bf16.gmra.mrb[0].mxu0 %v158
  %v356 = vpop.f32.mrb[0].mxu0
  %v357 = vadd.f32 %v80, %v356
  %v358 = vpop.f32.mrb[0].mxu0
  %v359 = vpop.f32.mrb[0].mxu0
  %v360 = vadd.f32 %v80, %v359
  %v361 = vpop.f32.mrb[0].mxu0
  %362 = vmatprep.mubr.bf16.mxu0 0
  %363 = vmatmul.mubr.bf16.gmra.mrb[0].mxu0 %v159
  %v364 = vpop.f32.mrb[0].mxu0
  %v365 = vadd.f32 %v80, %v364
  %v366 = vpop.f32.mrb[0].mxu0
  %v367 = vpop.f32.mrb[0].mxu0
  %v368 = vadd.f32 %v80, %v367
  %v369 = vpop.f32.mrb[0].mxu0
  %370 = vmatprep.mubr.bf16.mxu0 0
  %371 = vmatmul.mubr.bf16.gmra.mrb[0].mxu0 %v160
  %v372 = vpop.f32.mrb[0].mxu0
  %v373 = vadd.f32 %v80, %v372
  %v374 = vpop.f32.mrb[0].mxu0
  %v375 = vpop.f32.mrb[0].mxu0
  %v376 = vadd.f32 %v80, %v375
  %v377 = vpop.f32.mrb[0].mxu0
  %378 = vmatprep.mubr.bf16.mxu0 0
  %379 = vmatmul.mubr.bf16.gmra.mrb[0].mxu0 %v161
  %v380 = vpop.f32.mrb[0].mxu0
  %v381 = vadd.f32 %v80, %v380
  %v382 = vpop.f32.mrb[0].mxu0
  %v383 = vpop.f32.mrb[0].mxu0
  %v384 = vadd.f32 %v80, %v383
  %v385 = vpop.f32.mrb[0].mxu0
  %386 = vdwg.mxu0
  %v387 = vmax.f32 %v261, 0.0
  %v388 = vmax.f32 %v264, 0.0
  %v389 = vmax.f32 %v269, 0.0
  %v390 = vmax.f32 %v272, 0.0
  %v391 = vmax.f32 %v277, 0.0
  %v392 = vmax.f32 %v280, 0.0
  %v393 = vmax.f32 %v285, 0.0
  %v394 = vmax.f32 %v288, 0.0
  %v395 = vmax.f32 %v293, 0.0
  %v396 = vmax.f32 %v296, 0.0
  %v397 = vmax.f32 %v301, 0.0
  %v398 = vmax.f32 %v304, 0.0
  %v399 = vmax.f32 %v309, 0.0
  %v400 = vmax.f32 %v312, 0.0
  %v401 = vmax.f32 %v317, 0.0
  %v402 = vmax.f32 %v320, 0.0
  %v403 = vmax.f32 %v325, 0.0
  %v404 = vmax.f32 %v328, 0.0
  %v405 = vmax.f32 %v333, 0.0
  %v406 = vmax.f32 %v336, 0.0
  %v407 = vmax.f32 %v341, 0.0
  %v408 = vmax.f32 %v344, 0.0
  %v409 = vmax.f32 %v349, 0.0
  %v410 = vmax.f32 %v352, 0.0
  %v411 = vmax.f32 %v357, 0.0
  %v412 = vmax.f32 %v360, 0.0
  %v413 = vmax.f32 %v365, 0.0
  %v414 = vmax.f32 %v368, 0.0
  %v415 = vmax.f32 %v373, 0.0
  %v416 = vmax.f32 %v376, 0.0
  %v417 = vmax.f32 %v381, 0.0
  %v418 = vmax.f32 %v384, 0.0
  %v419 = vld [vmem:[%s3] sm:$0xf]
  %v420 = vld [vmem:[%s3 + $0x4] sm:$0xf]
  %v421 = vld [vmem:[%s3 + $0x8] sm:$0xf]
  %v422 = vld [vmem:[%s3 + $0xc] sm:$0xf]
  %v423 = vld [vmem:[%s3 + $0x10] sm:$0xf]
  %v424 = vld [vmem:[%s3 + $0x14] sm:$0xf]
  %v425 = vld [vmem:[%s3 + $0x18] sm:$0xf]
  %v426 = vld [vmem:[%s3 + $0x1c] sm:$0xf]
  %v427 = vld [vmem:[%s3 + $0x20] sm:$0xf]
  %v428 = vld [vmem:[%s3 + $0x24] sm:$0xf]
  %v429 = vld [vmem:[%s3 + $0x28] sm:$0xf]
  %v430 = vld [vmem:[%s3 + $0x2c] sm:$0xf]
  %v431 = vld [vmem:[%s3 + $0x30] sm:$0xf]
  %v432 = vld [vmem:[%s3 + $0x34] sm:$0xf]
  %v433 = vld [vmem:[%s3 + $0x38] sm:$0xf]
  %v434 = vld [vmem:[%s3 + $0x3c] sm:$0xf]
  %v435 = vpack.c.bf16 %v388, %v387
  %v436 = vpack.c.bf16 %v390, %v389
  %v437 = vpack.c.bf16 %v392, %v391
  %v438 = vpack.c.bf16 %v394, %v393
  %v439 = vpack.c.bf16 %v396, %v395
  %v440 = vpack.c.bf16 %v398, %v397
  %v441 = vpack.c.bf16 %v400, %v399
  %v442 = vpack.c.bf16 %v402, %v401
  %v443 = vpack.c.bf16 %v404, %v403
  %v444 = vpack.c.bf16 %v406, %v405
  %v445 = vpack.c.bf16 %v408, %v407
  %v446 = vpack.c.bf16 %v410, %v409
  %v447 = vpack.c.bf16 %v412, %v411
  %v448 = vpack.c.bf16 %v414, %v413
  %v449 = vpack.c.bf16 %v416, %v415
  %v450 = vpack.c.bf16 %v418, %v417
  %v451 = vld [vmem:[%s4] sm:$0x1]
  %v453 = vlaneseq
  %v454 = vshrl.u32 %v453, 7
  %v455 = vsub.s32 0, %v454
  %v456 = vrot.slane %v451, %v455
  %v474 = vunpack.c.l.b16 %v419
  %v475 = vunpack.c.l.b16 %v420
  %v476 = vunpack.c.l.b16 %v421
  %v477 = vunpack.c.l.b16 %v422
  %v478 = vunpack.c.l.b16 %v423
  %v479 = vunpack.c.l.b16 %v424
  %v480 = vunpack.c.l.b16 %v425
  %v481 = vunpack.c.l.b16 %v426
  %v482 = vunpack.c.l.b16 %v427
  %v483 = vunpack.c.l.b16 %v428
  %v484 = vunpack.c.l.b16 %v429
  %v485 = vunpack.c.l.b16 %v430
  %v486 = vunpack.c.l.b16 %v431
  %v487 = vunpack.c.l.b16 %v432
  %v488 = vunpack.c.l.b16 %v433
  %v489 = vunpack.c.l.b16 %v434
  %v490 = vpack.c.b16 %v475, %v474
  %v491 = vpack.c.b16 %v477, %v476
  %v492 = vpack.c.b16 %v479, %v478
  %v493 = vpack.c.b16 %v481, %v480
  %v494 = vpack.c.b16 %v483, %v482
  %v495 = vpack.c.b16 %v485, %v484
  %v496 = vpack.c.b16 %v487, %v486
  %v497 = vpack.c.b16 %v489, %v488
  %506 = vmatprep.subr.bf16.mxu0 0
  %507 = vmatpush1.bf16.msra.mxu0 %v490
  %508 = vmatprep.subr.bf16.mxu0 0
  %509 = vmatpush1.bf16.msra.mxu0 %v491
  %510 = vmatprep.subr.bf16.mxu0 0
  %511 = vmatpush1.bf16.msra.mxu0 %v492
  %512 = vmatprep.subr.bf16.mxu0 0
  %513 = vmatpush1.bf16.msra.mxu0 %v493
  %514 = vmatprep.subr.bf16.mxu0 0
  %515 = vmatpush1.bf16.msra.mxu0 %v494
  %516 = vmatprep.subr.bf16.mxu0 0
  %517 = vmatpush1.bf16.msra.mxu0 %v495
  %518 = vmatprep.subr.bf16.mxu0 0
  %519 = vmatpush1.bf16.msra.mxu0 %v496
  %520 = vmatprep.subr.bf16.mxu0 0
  %521 = vmatpush1.bf16.msra.mxu0 %v497
  %522 = vmatprep.subr.bf16.mxu0 0
  %523 = vmatpush1.bf16.msra.mxu0 0
  %524 = vmatprep.subr.bf16.mxu0 0
  %525 = vmatpush1.bf16.msra.mxu0 0
  %526 = vmatprep.subr.bf16.mxu0 0
  %527 = vmatpush1.bf16.msra.mxu0 0
  %528 = vmatprep.subr.bf16.mxu0 0
  %529 = vmatpush1.bf16.msra.mxu0 0
  %530 = vmatprep.subr.bf16.mxu0 0
  %531 = vmatpush1.bf16.msra.mxu0 0
  %532 = vmatprep.subr.bf16.mxu0 0
  %533 = vmatpush1.bf16.msra.mxu0 0
  %534 = vmatprep.subr.bf16.mxu0 0
  %535 = vmatpush1.bf16.msra.mxu0 0
  %536 = vmatprep.subr.bf16.mxu0 0
  %537 = vmatpush1.bf16.msra.mxu0 0
  %538 = vmatprep.mubr.bf16.mxu0 0
  %539 = vmatmul.mubr.bf16.gmra.mrb[0].mxu0 %v435
  %v540 = vpop.f32.mrb[0].mxu0
  %v541 = vadd.f32 %v456, %v540
  %v542 = vpop.f32.mrb[0].mxu0
  %v543 = vpop.f32.mrb[0].mxu0
  %v544 = vadd.f32 %v456, %v543
  %v545 = vpop.f32.mrb[0].mxu0
  %546 = vmatprep.mubr.bf16.mxu0 0
  %547 = vmatmul.mubr.bf16.gmra.mrb[0].mxu0 %v436
  %v548 = vpop.f32.mrb[0].mxu0
  %v549 = vadd.f32 %v456, %v548
  %v550 = vpop.f32.mrb[0].mxu0
  %v551 = vpop.f32.mrb[0].mxu0
  %v552 = vadd.f32 %v456, %v551
  %v553 = vpop.f32.mrb[0].mxu0
  %554 = vmatprep.mubr.bf16.mxu0 0
  %555 = vmatmul.mubr.bf16.gmra.mrb[0].mxu0 %v437
  %v556 = vpop.f32.mrb[0].mxu0
  %v557 = vadd.f32 %v456, %v556
  %v558 = vpop.f32.mrb[0].mxu0
  %v559 = vpop.f32.mrb[0].mxu0
  %v560 = vadd.f32 %v456, %v559
  %v561 = vpop.f32.mrb[0].mxu0
  %562 = vmatprep.mubr.bf16.mxu0 0
  %563 = vmatmul.mubr.bf16.gmra.mrb[0].mxu0 %v438
  %v564 = vpop.f32.mrb[0].mxu0
  %v565 = vadd.f32 %v456, %v564
  %v566 = vpop.f32.mrb[0].mxu0
  %v567 = vpop.f32.mrb[0].mxu0
  %v568 = vadd.f32 %v456, %v567
  %v569 = vpop.f32.mrb[0].mxu0
  %570 = vmatprep.mubr.bf16.mxu0 0
  %571 = vmatmul.mubr.bf16.gmra.mrb[0].mxu0 %v439
  %v572 = vpop.f32.mrb[0].mxu0
  %v573 = vadd.f32 %v456, %v572
  %v574 = vpop.f32.mrb[0].mxu0
  %v575 = vpop.f32.mrb[0].mxu0
  %v576 = vadd.f32 %v456, %v575
  %v577 = vpop.f32.mrb[0].mxu0
  %578 = vmatprep.mubr.bf16.mxu0 0
  %579 = vmatmul.mubr.bf16.gmra.mrb[0].mxu0 %v440
  %v580 = vpop.f32.mrb[0].mxu0
  %v581 = vadd.f32 %v456, %v580
  %v582 = vpop.f32.mrb[0].mxu0
  %v583 = vpop.f32.mrb[0].mxu0
  %v584 = vadd.f32 %v456, %v583
  %v585 = vpop.f32.mrb[0].mxu0
  %586 = vmatprep.mubr.bf16.mxu0 0
  %587 = vmatmul.mubr.bf16.gmra.mrb[0].mxu0 %v441
  %v588 = vpop.f32.mrb[0].mxu0
  %v589 = vadd.f32 %v456, %v588
  %v590 = vpop.f32.mrb[0].mxu0
  %v591 = vpop.f32.mrb[0].mxu0
  %v592 = vadd.f32 %v456, %v591
  %v593 = vpop.f32.mrb[0].mxu0
  %594 = vmatprep.mubr.bf16.mxu0 0
  %595 = vmatmul.mubr.bf16.gmra.mrb[0].mxu0 %v442
  %v596 = vpop.f32.mrb[0].mxu0
  %v597 = vadd.f32 %v456, %v596
  %v598 = vpop.f32.mrb[0].mxu0
  %v599 = vpop.f32.mrb[0].mxu0
  %v600 = vadd.f32 %v456, %v599
  %v601 = vpop.f32.mrb[0].mxu0
  %602 = vmatprep.mubr.bf16.mxu0 0
  %603 = vmatmul.mubr.bf16.gmra.mrb[0].mxu0 %v443
  %v604 = vpop.f32.mrb[0].mxu0
  %v605 = vadd.f32 %v456, %v604
  %v606 = vpop.f32.mrb[0].mxu0
  %v607 = vpop.f32.mrb[0].mxu0
  %v608 = vadd.f32 %v456, %v607
  %v609 = vpop.f32.mrb[0].mxu0
  %610 = vmatprep.mubr.bf16.mxu0 0
  %611 = vmatmul.mubr.bf16.gmra.mrb[0].mxu0 %v444
  %v612 = vpop.f32.mrb[0].mxu0
  %v613 = vadd.f32 %v456, %v612
  %v614 = vpop.f32.mrb[0].mxu0
  %v615 = vpop.f32.mrb[0].mxu0
  %v616 = vadd.f32 %v456, %v615
  %v617 = vpop.f32.mrb[0].mxu0
  %618 = vmatprep.mubr.bf16.mxu0 0
  %619 = vmatmul.mubr.bf16.gmra.mrb[0].mxu0 %v445
  %v620 = vpop.f32.mrb[0].mxu0
  %v621 = vadd.f32 %v456, %v620
  %v622 = vpop.f32.mrb[0].mxu0
  %v623 = vpop.f32.mrb[0].mxu0
  %v624 = vadd.f32 %v456, %v623
  %v625 = vpop.f32.mrb[0].mxu0
  %626 = vmatprep.mubr.bf16.mxu0 0
  %627 = vmatmul.mubr.bf16.gmra.mrb[0].mxu0 %v446
  %v628 = vpop.f32.mrb[0].mxu0
  %v629 = vadd.f32 %v456, %v628
  %v630 = vpop.f32.mrb[0].mxu0
  %v631 = vpop.f32.mrb[0].mxu0
  %v632 = vadd.f32 %v456, %v631
  %v633 = vpop.f32.mrb[0].mxu0
  %634 = vmatprep.mubr.bf16.mxu0 0
  %635 = vmatmul.mubr.bf16.gmra.mrb[0].mxu0 %v447
  %v636 = vpop.f32.mrb[0].mxu0
  %v637 = vadd.f32 %v456, %v636
  %v638 = vpop.f32.mrb[0].mxu0
  %v639 = vpop.f32.mrb[0].mxu0
  %v640 = vadd.f32 %v456, %v639
  %v641 = vpop.f32.mrb[0].mxu0
  %642 = vmatprep.mubr.bf16.mxu0 0
  %643 = vmatmul.mubr.bf16.gmra.mrb[0].mxu0 %v448
  %v644 = vpop.f32.mrb[0].mxu0
  %v645 = vadd.f32 %v456, %v644
  %v646 = vpop.f32.mrb[0].mxu0
  %v647 = vpop.f32.mrb[0].mxu0
  %v648 = vadd.f32 %v456, %v647
  %v649 = vpop.f32.mrb[0].mxu0
  %650 = vmatprep.mubr.bf16.mxu0 0
  %651 = vmatmul.mubr.bf16.gmra.mrb[0].mxu0 %v449
  %v652 = vpop.f32.mrb[0].mxu0
  %v653 = vadd.f32 %v456, %v652
  %v654 = vpop.f32.mrb[0].mxu0
  %v655 = vpop.f32.mrb[0].mxu0
  %v656 = vadd.f32 %v456, %v655
  %v657 = vpop.f32.mrb[0].mxu0
  %658 = vmatprep.mubr.bf16.mxu0 0
  %659 = vmatmul.mubr.bf16.gmra.mrb[0].mxu0 %v450
  %v660 = vpop.f32.mrb[0].mxu0
  %v661 = vadd.f32 %v456, %v660
  %v662 = vpop.f32.mrb[0].mxu0
  %v663 = vpop.f32.mrb[0].mxu0
  %v664 = vadd.f32 %v456, %v663
  %v665 = vpop.f32.mrb[0].mxu0
  %666 = vdwg.mxu0
  %v667 = vmax.f32 %v541, 0.0
  %v668 = vmax.f32 %v544, 0.0
  %v669 = vmax.f32 %v549, 0.0
  %v670 = vmax.f32 %v552, 0.0
  %v671 = vmax.f32 %v557, 0.0
  %v672 = vmax.f32 %v560, 0.0
  %v673 = vmax.f32 %v565, 0.0
  %v674 = vmax.f32 %v568, 0.0
  %v675 = vmax.f32 %v573, 0.0
  %v676 = vmax.f32 %v576, 0.0
  %v677 = vmax.f32 %v581, 0.0
  %v678 = vmax.f32 %v584, 0.0
  %v679 = vmax.f32 %v589, 0.0
  %v680 = vmax.f32 %v592, 0.0
  %v681 = vmax.f32 %v597, 0.0
  %v682 = vmax.f32 %v600, 0.0
  %v683 = vmax.f32 %v605, 0.0
  %v684 = vmax.f32 %v608, 0.0
  %v685 = vmax.f32 %v613, 0.0
  %v686 = vmax.f32 %v616, 0.0
  %v687 = vmax.f32 %v621, 0.0
  %v688 = vmax.f32 %v624, 0.0
  %v689 = vmax.f32 %v629, 0.0
  %v690 = vmax.f32 %v632, 0.0
  %v691 = vmax.f32 %v637, 0.0
  %v692 = vmax.f32 %v640, 0.0
  %v693 = vmax.f32 %v645, 0.0
  %v694 = vmax.f32 %v648, 0.0
  %v695 = vmax.f32 %v653, 0.0
  %v696 = vmax.f32 %v656, 0.0
  %v697 = vmax.f32 %v661, 0.0
  %v698 = vmax.f32 %v664, 0.0
  %s699 = scalar_lea.vmem %s3, 64
  %v700 = vld [vmem:[%s699] sm:$0xf]
  %v701 = vld [vmem:[%s699 + $0x4] sm:$0xf]
  %v702 = vld [vmem:[%s699 + $0x8] sm:$0xf]
  %v703 = vld [vmem:[%s699 + $0xc] sm:$0xf]
  %v704 = vld [vmem:[%s699 + $0x10] sm:$0xf]
  %v705 = vld [vmem:[%s699 + $0x14] sm:$0xf]
  %v706 = vld [vmem:[%s699 + $0x18] sm:$0xf]
  %v707 = vld [vmem:[%s699 + $0x1c] sm:$0xf]
  %v708 = vld [vmem:[%s699 + $0x20] sm:$0xf]
  %v709 = vld [vmem:[%s699 + $0x24] sm:$0xf]
  %v710 = vld [vmem:[%s699 + $0x28] sm:$0xf]
  %v711 = vld [vmem:[%s699 + $0x2c] sm:$0xf]
  %v712 = vld [vmem:[%s699 + $0x30] sm:$0xf]
  %v713 = vld [vmem:[%s699 + $0x34] sm:$0xf]
  %v714 = vld [vmem:[%s699 + $0x38] sm:$0xf]
  %v715 = vld [vmem:[%s699 + $0x3c] sm:$0xf]
  %v716 = vpack.c.bf16 %v668, %v667
  %v717 = vpack.c.bf16 %v670, %v669
  %v718 = vpack.c.bf16 %v672, %v671
  %v719 = vpack.c.bf16 %v674, %v673
  %v720 = vpack.c.bf16 %v676, %v675
  %v721 = vpack.c.bf16 %v678, %v677
  %v722 = vpack.c.bf16 %v680, %v679
  %v723 = vpack.c.bf16 %v682, %v681
  %v724 = vpack.c.bf16 %v684, %v683
  %v725 = vpack.c.bf16 %v686, %v685
  %v726 = vpack.c.bf16 %v688, %v687
  %v727 = vpack.c.bf16 %v690, %v689
  %v728 = vpack.c.bf16 %v692, %v691
  %v729 = vpack.c.bf16 %v694, %v693
  %v730 = vpack.c.bf16 %v696, %v695
  %v731 = vpack.c.bf16 %v698, %v697
  %s732 = scalar_lea.vmem %s4, 1
  %v733 = vld [vmem:[%s732] sm:$0x1]
  %v735 = vlaneseq
  %v736 = vshrl.u32 %v735, 7
  %v737 = vsub.s32 0, %v736
  %v738 = vrot.slane %v733, %v737
  %v756 = vunpack.c.l.b16 %v700
  %v757 = vunpack.c.l.b16 %v701
  %v758 = vunpack.c.l.b16 %v702
  %v759 = vunpack.c.l.b16 %v703
  %v760 = vunpack.c.l.b16 %v704
  %v761 = vunpack.c.l.b16 %v705
  %v762 = vunpack.c.l.b16 %v706
  %v763 = vunpack.c.l.b16 %v707
  %v764 = vunpack.c.l.b16 %v708
  %v765 = vunpack.c.l.b16 %v709
  %v766 = vunpack.c.l.b16 %v710
  %v767 = vunpack.c.l.b16 %v711
  %v768 = vunpack.c.l.b16 %v712
  %v769 = vunpack.c.l.b16 %v713
  %v770 = vunpack.c.l.b16 %v714
  %v771 = vunpack.c.l.b16 %v715
  %v772 = vpack.c.b16 %v757, %v756
  %v773 = vpack.c.b16 %v759, %v758
  %v774 = vpack.c.b16 %v761, %v760
  %v775 = vpack.c.b16 %v763, %v762
  %v776 = vpack.c.b16 %v765, %v764
  %v777 = vpack.c.b16 %v767, %v766
  %v778 = vpack.c.b16 %v769, %v768
  %v779 = vpack.c.b16 %v771, %v770
  %788 = vmatprep.subr.bf16.mxu0 0
  %789 = vmatpush1.bf16.msra.mxu0 %v772
  %790 = vmatprep.subr.bf16.mxu0 0
  %791 = vmatpush1.bf16.msra.mxu0 %v773
  %792 = vmatprep.subr.bf16.mxu0 0
  %793 = vmatpush1.bf16.msra.mxu0 %v774
  %794 = vmatprep.subr.bf16.mxu0 0
  %795 = vmatpush1.bf16.msra.mxu0 %v775
  %796 = vmatprep.subr.bf16.mxu0 0
  %797 = vmatpush1.bf16.msra.mxu0 %v776
  %798 = vmatprep.subr.bf16.mxu0 0
  %799 = vmatpush1.bf16.msra.mxu0 %v777
  %800 = vmatprep.subr.bf16.mxu0 0
  %801 = vmatpush1.bf16.msra.mxu0 %v778
  %802 = vmatprep.subr.bf16.mxu0 0
  %803 = vmatpush1.bf16.msra.mxu0 %v779
  %804 = vmatprep.subr.bf16.mxu0 0
  %805 = vmatpush1.bf16.msra.mxu0 0
  %806 = vmatprep.subr.bf16.mxu0 0
  %807 = vmatpush1.bf16.msra.mxu0 0
  %808 = vmatprep.subr.bf16.mxu0 0
  %809 = vmatpush1.bf16.msra.mxu0 0
  %810 = vmatprep.subr.bf16.mxu0 0
  %811 = vmatpush1.bf16.msra.mxu0 0
  %812 = vmatprep.subr.bf16.mxu0 0
  %813 = vmatpush1.bf16.msra.mxu0 0
  %814 = vmatprep.subr.bf16.mxu0 0
  %815 = vmatpush1.bf16.msra.mxu0 0
  %816 = vmatprep.subr.bf16.mxu0 0
  %817 = vmatpush1.bf16.msra.mxu0 0
  %818 = vmatprep.subr.bf16.mxu0 0
  %819 = vmatpush1.bf16.msra.mxu0 0
  %820 = vmatprep.mubr.bf16.mxu0 0
  %821 = vmatmul.mubr.bf16.gmra.mrb[0].mxu0 %v716
  %v822 = vpop.f32.mrb[0].mxu0
  %v823 = vadd.f32 %v738, %v822
  %v824 = vpop.f32.mrb[0].mxu0
  %v825 = vpop.f32.mrb[0].mxu0
  %v826 = vadd.f32 %v738, %v825
  %v827 = vpop.f32.mrb[0].mxu0
  %828 = vmatprep.mubr.bf16.mxu0 0
  %829 = vmatmul.mubr.bf16.gmra.mrb[0].mxu0 %v717
  %v830 = vpop.f32.mrb[0].mxu0
  %v831 = vadd.f32 %v738, %v830
  %v832 = vpop.f32.mrb[0].mxu0
  %v833 = vpop.f32.mrb[0].mxu0
  %v834 = vadd.f32 %v738, %v833
  %v835 = vpop.f32.mrb[0].mxu0
  %836 = vmatprep.mubr.bf16.mxu0 0
  %837 = vmatmul.mubr.bf16.gmra.mrb[0].mxu0 %v718
  %v838 = vpop.f32.mrb[0].mxu0
  %v839 = vadd.f32 %v738, %v838
  %v840 = vpop.f32.mrb[0].mxu0
  %v841 = vpop.f32.mrb[0].mxu0
  %v842 = vadd.f32 %v738, %v841
  %v843 = vpop.f32.mrb[0].mxu0
  %844 = vmatprep.mubr.bf16.mxu0 0
  %845 = vmatmul.mubr.bf16.gmra.mrb[0].mxu0 %v719
  %v846 = vpop.f32.mrb[0].mxu0
  %v847 = vadd.f32 %v738, %v846
  %v848 = vpop.f32.mrb[0].mxu0
  %v849 = vpop.f32.mrb[0].mxu0
  %v850 = vadd.f32 %v738, %v849
  %v851 = vpop.f32.mrb[0].mxu0
  %852 = vmatprep.mubr.bf16.mxu0 0
  %853 = vmatmul.mubr.bf16.gmra.mrb[0].mxu0 %v720
  %v854 = vpop.f32.mrb[0].mxu0
  %v855 = vadd.f32 %v738, %v854
  %v856 = vpop.f32.mrb[0].mxu0
  %v857 = vpop.f32.mrb[0].mxu0
  %v858 = vadd.f32 %v738, %v857
  %v859 = vpop.f32.mrb[0].mxu0
  %860 = vmatprep.mubr.bf16.mxu0 0
  %861 = vmatmul.mubr.bf16.gmra.mrb[0].mxu0 %v721
  %v862 = vpop.f32.mrb[0].mxu0
  %v863 = vadd.f32 %v738, %v862
  %v864 = vpop.f32.mrb[0].mxu0
  %v865 = vpop.f32.mrb[0].mxu0
  %v866 = vadd.f32 %v738, %v865
  %v867 = vpop.f32.mrb[0].mxu0
  %868 = vmatprep.mubr.bf16.mxu0 0
  %869 = vmatmul.mubr.bf16.gmra.mrb[0].mxu0 %v722
  %v870 = vpop.f32.mrb[0].mxu0
  %v871 = vadd.f32 %v738, %v870
  %v872 = vpop.f32.mrb[0].mxu0
  %v873 = vpop.f32.mrb[0].mxu0
  %v874 = vadd.f32 %v738, %v873
  %v875 = vpop.f32.mrb[0].mxu0
  %876 = vmatprep.mubr.bf16.mxu0 0
  %877 = vmatmul.mubr.bf16.gmra.mrb[0].mxu0 %v723
  %v878 = vpop.f32.mrb[0].mxu0
  %v879 = vadd.f32 %v738, %v878
  %v880 = vpop.f32.mrb[0].mxu0
  %v881 = vpop.f32.mrb[0].mxu0
  %v882 = vadd.f32 %v738, %v881
  %v883 = vpop.f32.mrb[0].mxu0
  %884 = vmatprep.mubr.bf16.mxu0 0
  %885 = vmatmul.mubr.bf16.gmra.mrb[0].mxu0 %v724
  %v886 = vpop.f32.mrb[0].mxu0
  %v887 = vadd.f32 %v738, %v886
  %v888 = vpop.f32.mrb[0].mxu0
  %v889 = vpop.f32.mrb[0].mxu0
  %v890 = vadd.f32 %v738, %v889
  %v891 = vpop.f32.mrb[0].mxu0
  %892 = vmatprep.mubr.bf16.mxu0 0
  %893 = vmatmul.mubr.bf16.gmra.mrb[0].mxu0 %v725
  %v894 = vpop.f32.mrb[0].mxu0
  %v895 = vadd.f32 %v738, %v894
  %v896 = vpop.f32.mrb[0].mxu0
  %v897 = vpop.f32.mrb[0].mxu0
  %v898 = vadd.f32 %v738, %v897
  %v899 = vpop.f32.mrb[0].mxu0
  %900 = vmatprep.mubr.bf16.mxu0 0
  %901 = vmatmul.mubr.bf16.gmra.mrb[0].mxu0 %v726
  %v902 = vpop.f32.mrb[0].mxu0
  %v903 = vadd.f32 %v738, %v902
  %v904 = vpop.f32.mrb[0].mxu0
  %v905 = vpop.f32.mrb[0].mxu0
  %v906 = vadd.f32 %v738, %v905
  %v907 = vpop.f32.mrb[0].mxu0
  %908 = vmatprep.mubr.bf16.mxu0 0
  %909 = vmatmul.mubr.bf16.gmra.mrb[0].mxu0 %v727
  %v910 = vpop.f32.mrb[0].mxu0
  %v911 = vadd.f32 %v738, %v910
  %v912 = vpop.f32.mrb[0].mxu0
  %v913 = vpop.f32.mrb[0].mxu0
  %v914 = vadd.f32 %v738, %v913
  %v915 = vpop.f32.mrb[0].mxu0
  %916 = vmatprep.mubr.bf16.mxu0 0
  %917 = vmatmul.mubr.bf16.gmra.mrb[0].mxu0 %v728
  %v918 = vpop.f32.mrb[0].mxu0
  %v919 = vadd.f32 %v738, %v918
  %v920 = vpop.f32.mrb[0].mxu0
  %v921 = vpop.f32.mrb[0].mxu0
  %v922 = vadd.f32 %v738, %v921
  %v923 = vpop.f32.mrb[0].mxu0
  %924 = vmatprep.mubr.bf16.mxu0 0
  %925 = vmatmul.mubr.bf16.gmra.mrb[0].mxu0 %v729
  %v926 = vpop.f32.mrb[0].mxu0
  %v927 = vadd.f32 %v738, %v926
  %v928 = vpop.f32.mrb[0].mxu0
  %v929 = vpop.f32.mrb[0].mxu0
  %v930 = vadd.f32 %v738, %v929
  %v931 = vpop.f32.mrb[0].mxu0
  %932 = vmatprep.mubr.bf16.mxu0 0
  %933 = vmatmul.mubr.bf16.gmra.mrb[0].mxu0 %v730
  %v934 = vpop.f32.mrb[0].mxu0
  %v935 = vadd.f32 %v738, %v934
  %v936 = vpop.f32.mrb[0].mxu0
  %v937 = vpop.f32.mrb[0].mxu0
  %v938 = vadd.f32 %v738, %v937
  %v939 = vpop.f32.mrb[0].mxu0
  %940 = vmatprep.mubr.bf16.mxu0 0
  %941 = vmatmul.mubr.bf16.gmra.mrb[0].mxu0 %v731
  %v942 = vpop.f32.mrb[0].mxu0
  %v943 = vadd.f32 %v738, %v942
  %v944 = vpop.f32.mrb[0].mxu0
  %v945 = vpop.f32.mrb[0].mxu0
  %v946 = vadd.f32 %v738, %v945
  %v947 = vpop.f32.mrb[0].mxu0
  %948 = vdwg.mxu0
  %v949 = vmax.f32 %v823, 0.0
  %v950 = vmax.f32 %v826, 0.0
  %v951 = vmax.f32 %v831, 0.0
  %v952 = vmax.f32 %v834, 0.0
  %v953 = vmax.f32 %v839, 0.0
  %v954 = vmax.f32 %v842, 0.0
  %v955 = vmax.f32 %v847, 0.0
  %v956 = vmax.f32 %v850, 0.0
  %v957 = vmax.f32 %v855, 0.0
  %v958 = vmax.f32 %v858, 0.0
  %v959 = vmax.f32 %v863, 0.0
  %v960 = vmax.f32 %v866, 0.0
  %v961 = vmax.f32 %v871, 0.0
  %v962 = vmax.f32 %v874, 0.0
  %v963 = vmax.f32 %v879, 0.0
  %v964 = vmax.f32 %v882, 0.0
  %v965 = vmax.f32 %v887, 0.0
  %v966 = vmax.f32 %v890, 0.0
  %v967 = vmax.f32 %v895, 0.0
  %v968 = vmax.f32 %v898, 0.0
  %v969 = vmax.f32 %v903, 0.0
  %v970 = vmax.f32 %v906, 0.0
  %v971 = vmax.f32 %v911, 0.0
  %v972 = vmax.f32 %v914, 0.0
  %v973 = vmax.f32 %v919, 0.0
  %v974 = vmax.f32 %v922, 0.0
  %v975 = vmax.f32 %v927, 0.0
  %v976 = vmax.f32 %v930, 0.0
  %v977 = vmax.f32 %v935, 0.0
  %v978 = vmax.f32 %v938, 0.0
  %v979 = vmax.f32 %v943, 0.0
  %v980 = vmax.f32 %v946, 0.0
  %v981 = vpack.c.bf16 %v950, %v949
  %v982 = vpack.c.bf16 %v952, %v951
  %v983 = vpack.c.bf16 %v954, %v953
  %v984 = vpack.c.bf16 %v956, %v955
  %v985 = vpack.c.bf16 %v958, %v957
  %v986 = vpack.c.bf16 %v960, %v959
  %v987 = vpack.c.bf16 %v962, %v961
  %v988 = vpack.c.bf16 %v964, %v963
  %v989 = vpack.c.bf16 %v966, %v965
  %v990 = vpack.c.bf16 %v968, %v967
  %v991 = vpack.c.bf16 %v970, %v969
  %v992 = vpack.c.bf16 %v972, %v971
  %v993 = vpack.c.bf16 %v974, %v973
  %v994 = vpack.c.bf16 %v976, %v975
  %v995 = vpack.c.bf16 %v978, %v977
  %v996 = vpack.c.bf16 %v980, %v979
  %v997 = vld [vmem:[%s5] sm:$0xf]
  %v998 = vld [vmem:[%s5 + $0x4] sm:$0xf]
  %v999 = vld [vmem:[%s5 + $0x8] sm:$0xf]
  %v1000 = vld [vmem:[%s5 + $0xc] sm:$0xf]
  %v1001 = vld [vmem:[%s5 + $0x10] sm:$0xf]
  %v1002 = vld [vmem:[%s5 + $0x14] sm:$0xf]
  %v1003 = vld [vmem:[%s5 + $0x18] sm:$0xf]
  %v1004 = vld [vmem:[%s5 + $0x1c] sm:$0xf]
  %v1005 = vld [vmem:[%s5 + $0x20] sm:$0xf]
  %v1006 = vld [vmem:[%s5 + $0x24] sm:$0xf]
  %v1007 = vld [vmem:[%s5 + $0x28] sm:$0xf]
  %v1008 = vld [vmem:[%s5 + $0x2c] sm:$0xf]
  %v1009 = vld [vmem:[%s5 + $0x30] sm:$0xf]
  %v1010 = vld [vmem:[%s5 + $0x34] sm:$0xf]
  %v1011 = vld [vmem:[%s5 + $0x38] sm:$0xf]
  %v1012 = vld [vmem:[%s5 + $0x3c] sm:$0xf]
  %v1013 = vld [vmem:[%s6] sm:$0x1]
  %v1015 = vlaneseq
  %v1016 = vshrl.u32 %v1015, 7
  %v1017 = vsub.s32 0, %v1016
  %v1018 = vrot.slane %v1013, %v1017
  %v1036 = vunpack.c.l.b16 %v997
  %v1037 = vunpack.c.l.b16 %v998
  %v1038 = vunpack.c.l.b16 %v999
  %v1039 = vunpack.c.l.b16 %v1000
  %v1040 = vunpack.c.l.b16 %v1001
  %v1041 = vunpack.c.l.b16 %v1002
  %v1042 = vunpack.c.l.b16 %v1003
  %v1043 = vunpack.c.l.b16 %v1004
  %v1044 = vunpack.c.l.b16 %v1005
  %v1045 = vunpack.c.l.b16 %v1006
  %v1046 = vunpack.c.l.b16 %v1007
  %v1047 = vunpack.c.l.b16 %v1008
  %v1048 = vunpack.c.l.b16 %v1009
  %v1049 = vunpack.c.l.b16 %v1010
  %v1050 = vunpack.c.l.b16 %v1011
  %v1051 = vunpack.c.l.b16 %v1012
  %v1052 = vpack.c.b16 %v1037, %v1036
  %v1053 = vpack.c.b16 %v1039, %v1038
  %v1054 = vpack.c.b16 %v1041, %v1040
  %v1055 = vpack.c.b16 %v1043, %v1042
  %v1056 = vpack.c.b16 %v1045, %v1044
  %v1057 = vpack.c.b16 %v1047, %v1046
  %v1058 = vpack.c.b16 %v1049, %v1048
  %v1059 = vpack.c.b16 %v1051, %v1050
  %1068 = vmatprep.subr.bf16.mxu0 0
  %1069 = vmatpush1.bf16.msra.mxu0 %v1052
  %1070 = vmatprep.subr.bf16.mxu0 0
  %1071 = vmatpush1.bf16.msra.mxu0 %v1053
  %1072 = vmatprep.subr.bf16.mxu0 0
  %1073 = vmatpush1.bf16.msra.mxu0 %v1054
  %1074 = vmatprep.subr.bf16.mxu0 0
  %1075 = vmatpush1.bf16.msra.mxu0 %v1055
  %1076 = vmatprep.subr.bf16.mxu0 0
  %1077 = vmatpush1.bf16.msra.mxu0 %v1056
  %1078 = vmatprep.subr.bf16.mxu0 0
  %1079 = vmatpush1.bf16.msra.mxu0 %v1057
  %1080 = vmatprep.subr.bf16.mxu0 0
  %1081 = vmatpush1.bf16.msra.mxu0 %v1058
  %1082 = vmatprep.subr.bf16.mxu0 0
  %1083 = vmatpush1.bf16.msra.mxu0 %v1059
  %1084 = vmatprep.subr.bf16.mxu0 0
  %1085 = vmatpush1.bf16.msra.mxu0 0
  %1086 = vmatprep.subr.bf16.mxu0 0
  %1087 = vmatpush1.bf16.msra.mxu0 0
  %1088 = vmatprep.subr.bf16.mxu0 0
  %1089 = vmatpush1.bf16.msra.mxu0 0
  %1090 = vmatprep.subr.bf16.mxu0 0
  %1091 = vmatpush1.bf16.msra.mxu0 0
  %1092 = vmatprep.subr.bf16.mxu0 0
  %1093 = vmatpush1.bf16.msra.mxu0 0
  %1094 = vmatprep.subr.bf16.mxu0 0
  %1095 = vmatpush1.bf16.msra.mxu0 0
  %1096 = vmatprep.subr.bf16.mxu0 0
  %1097 = vmatpush1.bf16.msra.mxu0 0
  %1098 = vmatprep.subr.bf16.mxu0 0
  %1099 = vmatpush1.bf16.msra.mxu0 0
  %1100 = vmatprep.mubr.bf16.mxu0 0
  %1101 = vmatmul.mubr.bf16.gmra.mrb[0].mxu0 %v981
  %v1102 = vpop.f32.mrb[0].mxu0
  %v1103 = vadd.f32 %v1018, %v1102
  %v1104 = vpop.f32.mrb[0].mxu0
  %v1105 = vpop.f32.mrb[0].mxu0
  %v1106 = vadd.f32 %v1018, %v1105
  %v1107 = vpop.f32.mrb[0].mxu0
  %1108 = vmatprep.mubr.bf16.mxu0 0
  %1109 = vmatmul.mubr.bf16.gmra.mrb[0].mxu0 %v982
  %v1110 = vpop.f32.mrb[0].mxu0
  %v1111 = vadd.f32 %v1018, %v1110
  %v1112 = vpop.f32.mrb[0].mxu0
  %v1113 = vpop.f32.mrb[0].mxu0
  %v1114 = vadd.f32 %v1018, %v1113
  %v1115 = vpop.f32.mrb[0].mxu0
  %1116 = vmatprep.mubr.bf16.mxu0 0
  %1117 = vmatmul.mubr.bf16.gmra.mrb[0].mxu0 %v983
  %v1118 = vpop.f32.mrb[0].mxu0
  %v1119 = vadd.f32 %v1018, %v1118
  %v1120 = vpop.f32.mrb[0].mxu0
  %v1121 = vpop.f32.mrb[0].mxu0
  %v1122 = vadd.f32 %v1018, %v1121
  %v1123 = vpop.f32.mrb[0].mxu0
  %1124 = vmatprep.mubr.bf16.mxu0 0
  %1125 = vmatmul.mubr.bf16.gmra.mrb[0].mxu0 %v984
  %v1126 = vpop.f32.mrb[0].mxu0
  %v1127 = vadd.f32 %v1018, %v1126
  %v1128 = vpop.f32.mrb[0].mxu0
  %v1129 = vpop.f32.mrb[0].mxu0
  %v1130 = vadd.f32 %v1018, %v1129
  %v1131 = vpop.f32.mrb[0].mxu0
  %1132 = vmatprep.mubr.bf16.mxu0 0
  %1133 = vmatmul.mubr.bf16.gmra.mrb[0].mxu0 %v985
  %v1134 = vpop.f32.mrb[0].mxu0
  %v1135 = vadd.f32 %v1018, %v1134
  %v1136 = vpop.f32.mrb[0].mxu0
  %v1137 = vpop.f32.mrb[0].mxu0
  %v1138 = vadd.f32 %v1018, %v1137
  %v1139 = vpop.f32.mrb[0].mxu0
  %1140 = vmatprep.mubr.bf16.mxu0 0
  %1141 = vmatmul.mubr.bf16.gmra.mrb[0].mxu0 %v986
  %v1142 = vpop.f32.mrb[0].mxu0
  %v1143 = vadd.f32 %v1018, %v1142
  %v1144 = vpop.f32.mrb[0].mxu0
  %v1145 = vpop.f32.mrb[0].mxu0
  %v1146 = vadd.f32 %v1018, %v1145
  %v1147 = vpop.f32.mrb[0].mxu0
  %1148 = vmatprep.mubr.bf16.mxu0 0
  %1149 = vmatmul.mubr.bf16.gmra.mrb[0].mxu0 %v987
  %v1150 = vpop.f32.mrb[0].mxu0
  %v1151 = vadd.f32 %v1018, %v1150
  %v1152 = vpop.f32.mrb[0].mxu0
  %v1153 = vpop.f32.mrb[0].mxu0
  %v1154 = vadd.f32 %v1018, %v1153
  %v1155 = vpop.f32.mrb[0].mxu0
  %1156 = vmatprep.mubr.bf16.mxu0 0
  %1157 = vmatmul.mubr.bf16.gmra.mrb[0].mxu0 %v988
  %v1158 = vpop.f32.mrb[0].mxu0
  %v1159 = vadd.f32 %v1018, %v1158
  %v1160 = vpop.f32.mrb[0].mxu0
  %v1161 = vpop.f32.mrb[0].mxu0
  %v1162 = vadd.f32 %v1018, %v1161
  %v1163 = vpop.f32.mrb[0].mxu0
  %1164 = vmatprep.mubr.bf16.mxu0 0
  %1165 = vmatmul.mubr.bf16.gmra.mrb[0].mxu0 %v989
  %v1166 = vpop.f32.mrb[0].mxu0
  %v1167 = vadd.f32 %v1018, %v1166
  %v1168 = vpop.f32.mrb[0].mxu0
  %v1169 = vpop.f32.mrb[0].mxu0
  %v1170 = vadd.f32 %v1018, %v1169
  %v1171 = vpop.f32.mrb[0].mxu0
  %1172 = vmatprep.mubr.bf16.mxu0 0
  %1173 = vmatmul.mubr.bf16.gmra.mrb[0].mxu0 %v990
  %v1174 = vpop.f32.mrb[0].mxu0
  %v1175 = vadd.f32 %v1018, %v1174
  %v1176 = vpop.f32.mrb[0].mxu0
  %v1177 = vpop.f32.mrb[0].mxu0
  %v1178 = vadd.f32 %v1018, %v1177
  %v1179 = vpop.f32.mrb[0].mxu0
  %1180 = vmatprep.mubr.bf16.mxu0 0
  %1181 = vmatmul.mubr.bf16.gmra.mrb[0].mxu0 %v991
  %v1182 = vpop.f32.mrb[0].mxu0
  %v1183 = vadd.f32 %v1018, %v1182
  %v1184 = vpop.f32.mrb[0].mxu0
  %v1185 = vpop.f32.mrb[0].mxu0
  %v1186 = vadd.f32 %v1018, %v1185
  %v1187 = vpop.f32.mrb[0].mxu0
  %1188 = vmatprep.mubr.bf16.mxu0 0
  %1189 = vmatmul.mubr.bf16.gmra.mrb[0].mxu0 %v992
  %v1190 = vpop.f32.mrb[0].mxu0
  %v1191 = vadd.f32 %v1018, %v1190
  %v1192 = vpop.f32.mrb[0].mxu0
  %v1193 = vpop.f32.mrb[0].mxu0
  %v1194 = vadd.f32 %v1018, %v1193
  %v1195 = vpop.f32.mrb[0].mxu0
  %1196 = vmatprep.mubr.bf16.mxu0 0
  %1197 = vmatmul.mubr.bf16.gmra.mrb[0].mxu0 %v993
  %v1198 = vpop.f32.mrb[0].mxu0
  %v1199 = vadd.f32 %v1018, %v1198
  %v1200 = vpop.f32.mrb[0].mxu0
  %v1201 = vpop.f32.mrb[0].mxu0
  %v1202 = vadd.f32 %v1018, %v1201
  %v1203 = vpop.f32.mrb[0].mxu0
  %1204 = vmatprep.mubr.bf16.mxu0 0
  %1205 = vmatmul.mubr.bf16.gmra.mrb[0].mxu0 %v994
  %v1206 = vpop.f32.mrb[0].mxu0
  %v1207 = vadd.f32 %v1018, %v1206
  %v1208 = vpop.f32.mrb[0].mxu0
  %v1209 = vpop.f32.mrb[0].mxu0
  %v1210 = vadd.f32 %v1018, %v1209
  %v1211 = vpop.f32.mrb[0].mxu0
  %1212 = vmatprep.mubr.bf16.mxu0 0
  %1213 = vmatmul.mubr.bf16.gmra.mrb[0].mxu0 %v995
  %v1214 = vpop.f32.mrb[0].mxu0
  %v1215 = vadd.f32 %v1018, %v1214
  %v1216 = vpop.f32.mrb[0].mxu0
  %v1217 = vpop.f32.mrb[0].mxu0
  %v1218 = vadd.f32 %v1018, %v1217
  %v1219 = vpop.f32.mrb[0].mxu0
  %1220 = vmatprep.mubr.bf16.mxu0 0
  %1221 = vmatmul.mubr.bf16.gmra.mrb[0].mxu0 %v996
  %v1222 = vpop.f32.mrb[0].mxu0
  %v1223 = vadd.f32 %v1018, %v1222
  %v1224 = vpop.f32.mrb[0].mxu0
  %v1225 = vpop.f32.mrb[0].mxu0
  %v1226 = vadd.f32 %v1018, %v1225
  %v1227 = vpop.f32.mrb[0].mxu0
  %1228 = vdwg.mxu0
  %1229 = vmax.xlane.f32.xlu0 %v1103
  %v1230 = vpop.xlane.xlu0 %1229
  %1231 = vmax.xlane.f32.xlu0 %v1106
  %v1232 = vpop.xlane.xlu0 %1231
  %1233 = vmax.xlane.f32.xlu0 %v1111
  %v1234 = vpop.xlane.xlu0 %1233
  %1235 = vmax.xlane.f32.xlu0 %v1114
  %v1236 = vpop.xlane.xlu0 %1235
  %1237 = vmax.xlane.f32.xlu0 %v1119
  %v1238 = vpop.xlane.xlu0 %1237
  %1239 = vmax.xlane.f32.xlu0 %v1122
  %v1240 = vpop.xlane.xlu0 %1239
  %1241 = vmax.xlane.f32.xlu0 %v1127
  %v1242 = vpop.xlane.xlu0 %1241
  %1243 = vmax.xlane.f32.xlu0 %v1130
  %v1244 = vpop.xlane.xlu0 %1243
  %1245 = vmax.xlane.f32.xlu0 %v1135
  %v1246 = vpop.xlane.xlu0 %1245
  %1247 = vmax.xlane.f32.xlu0 %v1138
  %v1248 = vpop.xlane.xlu0 %1247
  %1249 = vmax.xlane.f32.xlu0 %v1143
  %v1250 = vpop.xlane.xlu0 %1249
  %1251 = vmax.xlane.f32.xlu0 %v1146
  %v1252 = vpop.xlane.xlu0 %1251
  %1253 = vmax.xlane.f32.xlu0 %v1151
  %v1254 = vpop.xlane.xlu0 %1253
  %1255 = vmax.xlane.f32.xlu0 %v1154
  %v1256 = vpop.xlane.xlu0 %1255
  %1257 = vmax.xlane.f32.xlu0 %v1159
  %v1258 = vpop.xlane.xlu0 %1257
  %1259 = vmax.xlane.f32.xlu0 %v1162
  %v1260 = vpop.xlane.xlu0 %1259
  %1261 = vmax.xlane.f32.xlu0 %v1167
  %v1262 = vpop.xlane.xlu0 %1261
  %1263 = vmax.xlane.f32.xlu0 %v1170
  %v1264 = vpop.xlane.xlu0 %1263
  %1265 = vmax.xlane.f32.xlu0 %v1175
  %v1266 = vpop.xlane.xlu0 %1265
  %1267 = vmax.xlane.f32.xlu0 %v1178
  %v1268 = vpop.xlane.xlu0 %1267
  %1269 = vmax.xlane.f32.xlu0 %v1183
  %v1270 = vpop.xlane.xlu0 %1269
  %1271 = vmax.xlane.f32.xlu0 %v1186
  %v1272 = vpop.xlane.xlu0 %1271
  %1273 = vmax.xlane.f32.xlu0 %v1191
  %v1274 = vpop.xlane.xlu0 %1273
  %1275 = vmax.xlane.f32.xlu0 %v1194
  %v1276 = vpop.xlane.xlu0 %1275
  %1277 = vmax.xlane.f32.xlu0 %v1199
  %v1278 = vpop.xlane.xlu0 %1277
  %1279 = vmax.xlane.f32.xlu0 %v1202
  %v1280 = vpop.xlane.xlu0 %1279
  %1281 = vmax.xlane.f32.xlu0 %v1207
  %v1282 = vpop.xlane.xlu0 %1281
  %1283 = vmax.xlane.f32.xlu0 %v1210
  %v1284 = vpop.xlane.xlu0 %1283
  %1285 = vmax.xlane.f32.xlu0 %v1215
  %v1286 = vpop.xlane.xlu0 %1285
  %1287 = vmax.xlane.f32.xlu0 %v1218
  %v1288 = vpop.xlane.xlu0 %1287
  %1289 = vmax.xlane.f32.xlu0 %v1223
  %v1290 = vpop.xlane.xlu0 %1289
  %1291 = vmax.xlane.f32.xlu0 %v1226
  %v1292 = vpop.xlane.xlu0 %1291
  %v1293 = vsub.f32 %v1103, %v1230
  %v1294 = vsub.f32 %v1106, %v1232
  %v1295 = vsub.f32 %v1111, %v1234
  %v1296 = vsub.f32 %v1114, %v1236
  %v1297 = vsub.f32 %v1119, %v1238
  %v1298 = vsub.f32 %v1122, %v1240
  %v1299 = vsub.f32 %v1127, %v1242
  %v1300 = vsub.f32 %v1130, %v1244
  %v1301 = vsub.f32 %v1135, %v1246
  %v1302 = vsub.f32 %v1138, %v1248
  %v1303 = vsub.f32 %v1143, %v1250
  %v1304 = vsub.f32 %v1146, %v1252
  %v1305 = vsub.f32 %v1151, %v1254
  %v1306 = vsub.f32 %v1154, %v1256
  %v1307 = vsub.f32 %v1159, %v1258
  %v1308 = vsub.f32 %v1162, %v1260
  %v1309 = vsub.f32 %v1167, %v1262
  %v1310 = vsub.f32 %v1170, %v1264
  %v1311 = vsub.f32 %v1175, %v1266
  %v1312 = vsub.f32 %v1178, %v1268
  %v1313 = vsub.f32 %v1183, %v1270
  %v1314 = vsub.f32 %v1186, %v1272
  %v1315 = vsub.f32 %v1191, %v1274
  %v1316 = vsub.f32 %v1194, %v1276
  %v1317 = vsub.f32 %v1199, %v1278
  %v1318 = vsub.f32 %v1202, %v1280
  %v1319 = vsub.f32 %v1207, %v1282
  %v1320 = vsub.f32 %v1210, %v1284
  %v1321 = vsub.f32 %v1215, %v1286
  %v1322 = vsub.f32 %v1218, %v1288
  %v1323 = vsub.f32 %v1223, %v1290
  %v1324 = vsub.f32 %v1226, %v1292
  %v1325 = vmul.f32 %v1293, 1.442695
  %v1326 = vpow.pop %v1325
  %v1327 = vmul.f32 %v1294, 1.442695
  %v1328 = vpow.pop %v1327
  %v1329 = vmul.f32 %v1295, 1.442695
  %v1330 = vpow.pop %v1329
  %v1331 = vmul.f32 %v1296, 1.442695
  %v1332 = vpow.pop %v1331
  %v1333 = vmul.f32 %v1297, 1.442695
  %v1334 = vpow.pop %v1333
  %v1335 = vmul.f32 %v1298, 1.442695
  %v1336 = vpow.pop %v1335
  %v1337 = vmul.f32 %v1299, 1.442695
  %v1338 = vpow.pop %v1337
  %v1339 = vmul.f32 %v1300, 1.442695
  %v1340 = vpow.pop %v1339
  %v1341 = vmul.f32 %v1301, 1.442695
  %v1342 = vpow.pop %v1341
  %v1343 = vmul.f32 %v1302, 1.442695
  %v1344 = vpow.pop %v1343
  %v1345 = vmul.f32 %v1303, 1.442695
  %v1346 = vpow.pop %v1345
  %v1347 = vmul.f32 %v1304, 1.442695
  %v1348 = vpow.pop %v1347
  %v1349 = vmul.f32 %v1305, 1.442695
  %v1350 = vpow.pop %v1349
  %v1351 = vmul.f32 %v1306, 1.442695
  %v1352 = vpow.pop %v1351
  %v1353 = vmul.f32 %v1307, 1.442695
  %v1354 = vpow.pop %v1353
  %v1355 = vmul.f32 %v1308, 1.442695
  %v1356 = vpow.pop %v1355
  %v1357 = vmul.f32 %v1309, 1.442695
  %v1358 = vpow.pop %v1357
  %v1359 = vmul.f32 %v1310, 1.442695
  %v1360 = vpow.pop %v1359
  %v1361 = vmul.f32 %v1311, 1.442695
  %v1362 = vpow.pop %v1361
  %v1363 = vmul.f32 %v1312, 1.442695
  %v1364 = vpow.pop %v1363
  %v1365 = vmul.f32 %v1313, 1.442695
  %v1366 = vpow.pop %v1365
  %v1367 = vmul.f32 %v1314, 1.442695
  %v1368 = vpow.pop %v1367
  %v1369 = vmul.f32 %v1315, 1.442695
  %v1370 = vpow.pop %v1369
  %v1371 = vmul.f32 %v1316, 1.442695
  %v1372 = vpow.pop %v1371
  %v1373 = vmul.f32 %v1317, 1.442695
  %v1374 = vpow.pop %v1373
  %v1375 = vmul.f32 %v1318, 1.442695
  %v1376 = vpow.pop %v1375
  %v1377 = vmul.f32 %v1319, 1.442695
  %v1378 = vpow.pop %v1377
  %v1379 = vmul.f32 %v1320, 1.442695
  %v1380 = vpow.pop %v1379
  %v1381 = vmul.f32 %v1321, 1.442695
  %v1382 = vpow.pop %v1381
  %v1383 = vmul.f32 %v1322, 1.442695
  %v1384 = vpow.pop %v1383
  %v1385 = vmul.f32 %v1323, 1.442695
  %v1386 = vpow.pop %v1385
  %v1387 = vmul.f32 %v1324, 1.442695
  %v1388 = vpow.pop %v1387
  %1389 = vadd.xlane.f32.xlu0 %v1326
  %v1390 = vpop.xlane.xlu0 %1389
  %1391 = vadd.xlane.f32.xlu0 %v1328
  %v1392 = vpop.xlane.xlu0 %1391
  %1393 = vadd.xlane.f32.xlu0 %v1330
  %v1394 = vpop.xlane.xlu0 %1393
  %1395 = vadd.xlane.f32.xlu0 %v1332
  %v1396 = vpop.xlane.xlu0 %1395
  %1397 = vadd.xlane.f32.xlu0 %v1334
  %v1398 = vpop.xlane.xlu0 %1397
  %1399 = vadd.xlane.f32.xlu0 %v1336
  %v1400 = vpop.xlane.xlu0 %1399
  %1401 = vadd.xlane.f32.xlu0 %v1338
  %v1402 = vpop.xlane.xlu0 %1401
  %1403 = vadd.xlane.f32.xlu0 %v1340
  %v1404 = vpop.xlane.xlu0 %1403
  %1405 = vadd.xlane.f32.xlu0 %v1342
  %v1406 = vpop.xlane.xlu0 %1405
  %1407 = vadd.xlane.f32.xlu0 %v1344
  %v1408 = vpop.xlane.xlu0 %1407
  %1409 = vadd.xlane.f32.xlu0 %v1346
  %v1410 = vpop.xlane.xlu0 %1409
  %1411 = vadd.xlane.f32.xlu0 %v1348
  %v1412 = vpop.xlane.xlu0 %1411
  %1413 = vadd.xlane.f32.xlu0 %v1350
  %v1414 = vpop.xlane.xlu0 %1413
  %1415 = vadd.xlane.f32.xlu0 %v1352
  %v1416 = vpop.xlane.xlu0 %1415
  %1417 = vadd.xlane.f32.xlu0 %v1354
  %v1418 = vpop.xlane.xlu0 %1417
  %1419 = vadd.xlane.f32.xlu0 %v1356
  %v1420 = vpop.xlane.xlu0 %1419
  %1421 = vadd.xlane.f32.xlu0 %v1358
  %v1422 = vpop.xlane.xlu0 %1421
  %1423 = vadd.xlane.f32.xlu0 %v1360
  %v1424 = vpop.xlane.xlu0 %1423
  %1425 = vadd.xlane.f32.xlu0 %v1362
  %v1426 = vpop.xlane.xlu0 %1425
  %1427 = vadd.xlane.f32.xlu0 %v1364
  %v1428 = vpop.xlane.xlu0 %1427
  %1429 = vadd.xlane.f32.xlu0 %v1366
  %v1430 = vpop.xlane.xlu0 %1429
  %1431 = vadd.xlane.f32.xlu0 %v1368
  %v1432 = vpop.xlane.xlu0 %1431
  %1433 = vadd.xlane.f32.xlu0 %v1370
  %v1434 = vpop.xlane.xlu0 %1433
  %1435 = vadd.xlane.f32.xlu0 %v1372
  %v1436 = vpop.xlane.xlu0 %1435
  %1437 = vadd.xlane.f32.xlu0 %v1374
  %v1438 = vpop.xlane.xlu0 %1437
  %1439 = vadd.xlane.f32.xlu0 %v1376
  %v1440 = vpop.xlane.xlu0 %1439
  %1441 = vadd.xlane.f32.xlu0 %v1378
  %v1442 = vpop.xlane.xlu0 %1441
  %1443 = vadd.xlane.f32.xlu0 %v1380
  %v1444 = vpop.xlane.xlu0 %1443
  %1445 = vadd.xlane.f32.xlu0 %v1382
  %v1446 = vpop.xlane.xlu0 %1445
  %1447 = vadd.xlane.f32.xlu0 %v1384
  %v1448 = vpop.xlane.xlu0 %1447
  %1449 = vadd.xlane.f32.xlu0 %v1386
  %v1450 = vpop.xlane.xlu0 %1449
  %1451 = vadd.xlane.f32.xlu0 %v1388
  %v1452 = vpop.xlane.xlu0 %1451
  %v1453 = vrcp.pop %v1390
  %v1454 = vrcp.pop %v1392
  %v1455 = vrcp.pop %v1394
  %v1456 = vrcp.pop %v1396
  %v1457 = vrcp.pop %v1398
  %v1458 = vrcp.pop %v1400
  %v1459 = vrcp.pop %v1402
  %v1460 = vrcp.pop %v1404
  %v1461 = vrcp.pop %v1406
  %v1462 = vrcp.pop %v1408
  %v1463 = vrcp.pop %v1410
  %v1464 = vrcp.pop %v1412
  %v1465 = vrcp.pop %v1414
  %v1466 = vrcp.pop %v1416
  %v1467 = vrcp.pop %v1418
  %v1468 = vrcp.pop %v1420
  %v1469 = vrcp.pop %v1422
  %v1470 = vrcp.pop %v1424
  %v1471 = vrcp.pop %v1426
  %v1472 = vrcp.pop %v1428
  %v1473 = vrcp.pop %v1430
  %v1474 = vrcp.pop %v1432
  %v1475 = vrcp.pop %v1434
  %v1476 = vrcp.pop %v1436
  %v1477 = vrcp.pop %v1438
  %v1478 = vrcp.pop %v1440
  %v1479 = vrcp.pop %v1442
  %v1480 = vrcp.pop %v1444
  %v1481 = vrcp.pop %v1446
  %v1482 = vrcp.pop %v1448
  %v1483 = vrcp.pop %v1450
  %v1484 = vrcp.pop %v1452
  %v1485 = vmul.f32 %v1326, %v1453
  %v1486 = vmul.f32 %v1328, %v1454
  %v1487 = vmul.f32 %v1330, %v1455
  %v1488 = vmul.f32 %v1332, %v1456
  %v1489 = vmul.f32 %v1334, %v1457
  %v1490 = vmul.f32 %v1336, %v1458
  %v1491 = vmul.f32 %v1338, %v1459
  %v1492 = vmul.f32 %v1340, %v1460
  %v1493 = vmul.f32 %v1342, %v1461
  %v1494 = vmul.f32 %v1344, %v1462
  %v1495 = vmul.f32 %v1346, %v1463
  %v1496 = vmul.f32 %v1348, %v1464
  %v1497 = vmul.f32 %v1350, %v1465
  %v1498 = vmul.f32 %v1352, %v1466
  %v1499 = vmul.f32 %v1354, %v1467
  %v1500 = vmul.f32 %v1356, %v1468
  %v1501 = vmul.f32 %v1358, %v1469
  %v1502 = vmul.f32 %v1360, %v1470
  %v1503 = vmul.f32 %v1362, %v1471
  %v1504 = vmul.f32 %v1364, %v1472
  %v1505 = vmul.f32 %v1366, %v1473
  %v1506 = vmul.f32 %v1368, %v1474
  %v1507 = vmul.f32 %v1370, %v1475
  %v1508 = vmul.f32 %v1372, %v1476
  %v1509 = vmul.f32 %v1374, %v1477
  %v1510 = vmul.f32 %v1376, %v1478
  %v1511 = vmul.f32 %v1378, %v1479
  %v1512 = vmul.f32 %v1380, %v1480
  %v1513 = vmul.f32 %v1382, %v1481
  %v1514 = vmul.f32 %v1384, %v1482
  %v1515 = vmul.f32 %v1386, %v1483
  %v1516 = vmul.f32 %v1388, %v1484
  %1517 = vst [vmem:[%s7] sm:$0xff] %v1485
  %1518 = vst [vmem:[%s7 + $0x8] sm:$0xff] %v1486
  %1519 = vst [vmem:[%s7 + $0x10] sm:$0xff] %v1487
  %1520 = vst [vmem:[%s7 + $0x18] sm:$0xff] %v1488
  %1521 = vst [vmem:[%s7 + $0x20] sm:$0xff] %v1489
  %1522 = vst [vmem:[%s7 + $0x28] sm:$0xff] %v1490
  %1523 = vst [vmem:[%s7 + $0x30] sm:$0xff] %v1491
  %1524 = vst [vmem:[%s7 + $0x38] sm:$0xff] %v1492
  %1525 = vst [vmem:[%s7 + $0x40] sm:$0xff] %v1493
  %1526 = vst [vmem:[%s7 + $0x48] sm:$0xff] %v1494
  %1527 = vst [vmem:[%s7 + $0x50] sm:$0xff] %v1495
  %1528 = vst [vmem:[%s7 + $0x58] sm:$0xff] %v1496
  %1529 = vst [vmem:[%s7 + $0x60] sm:$0xff] %v1497
  %1530 = vst [vmem:[%s7 + $0x68] sm:$0xff] %v1498
  %1531 = vst [vmem:[%s7 + $0x70] sm:$0xff] %v1499
  %1532 = vst [vmem:[%s7 + $0x78] sm:$0xff] %v1500
  %1533 = vst [vmem:[%s7 + $0x80] sm:$0xff] %v1501
  %1534 = vst [vmem:[%s7 + $0x88] sm:$0xff] %v1502
  %1535 = vst [vmem:[%s7 + $0x90] sm:$0xff] %v1503
  %1536 = vst [vmem:[%s7 + $0x98] sm:$0xff] %v1504
  %1537 = vst [vmem:[%s7 + $0xa0] sm:$0xff] %v1505
  %1538 = vst [vmem:[%s7 + $0xa8] sm:$0xff] %v1506
  %1539 = vst [vmem:[%s7 + $0xb0] sm:$0xff] %v1507
  %1540 = vst [vmem:[%s7 + $0xb8] sm:$0xff] %v1508
  %1541 = vst [vmem:[%s7 + $0xc0] sm:$0xff] %v1509
  %1542 = vst [vmem:[%s7 + $0xc8] sm:$0xff] %v1510
  %1543 = vst [vmem:[%s7 + $0xd0] sm:$0xff] %v1511
  %1544 = vst [vmem:[%s7 + $0xd8] sm:$0xff] %v1512
  %1545 = vst [vmem:[%s7 + $0xe0] sm:$0xff] %v1513
  %1546 = vst [vmem:[%s7 + $0xe8] sm:$0xff] %v1514
  %1547 = vst [vmem:[%s7 + $0xf0] sm:$0xff] %v1515
  %1548 = vst [vmem:[%s7 + $0xf8] sm:$0xff] %v1516
  // Predicated region
  $region30: #{torch_model_forward.1} parent=0 // pred_check
    _
  $region31: #{torch_model_forward.1} parent=0 // pred_check_branch
    %1550 = sbr.rel (0) target = $region33
  $region32: #{torch_model_forward.1} parent=0 // pred_region
    _
  $region33: #{torch_model_forward.1} parent=0 // pred_fallthru
    _
  // Predicated region
  $region34: #{torch_model_forward.1} parent=0 // pred_check
    _
  $region35: #{torch_model_forward.1} parent=0 // pred_check_branch
    %1552 = sbr.rel (0) target = $region37
  $region36: #{torch_model_forward.1} parent=0 // pred_region
    _
  $region37: #{torch_model_forward.1} parent=0 // pred_fallthru
    _

</llo_original>
